<compile_context>
chip_gen: v5e
topology: v5e:2x2
jax: 0.10.0
libtpu: 0.0.40
codegen_flags: <defaults>
</compile_context>

<pallas_src>
import functools

import jax
import jax.numpy as jnp
from jax.experimental import pallas as pl
from jax.experimental.pallas import tpu as pltpu

TILE_M = 1024                         # M tile cap: multiple of 8, near-roofline point
VMEM_LIMIT_BYTES = 32 * 1024 * 1024   # explicit scoped-VMEM budget (fits all gens)
LANES = 128


def _round_up(x, m):
    return (x + m - 1) // m * m


# ----------------------------------------------------------------------------
# Pallas kernels
# ----------------------------------------------------------------------------
def _linear_kernel(x_ref, w_ref, b_ref, o_ref, *, relu):
    """o = relu?(x @ w + b).  x cast to bf16 in-kernel (uint8 pixels OK)."""
    x = x_ref[...]
    if x.dtype != jnp.bfloat16:
        # in-kernel uint8 -> bf16 (integers 0..255 are exact in bf16)
        x = x.astype(jnp.float32).astype(jnp.bfloat16)
    y = jnp.dot(x, w_ref[...], preferred_element_type=jnp.float32)
    y = y + b_ref[...]
    if relu:
        y = jnp.maximum(y, 0.0)
    o_ref[...] = y.astype(o_ref.dtype)


def _fc_head_kernel(x_ref, w1_ref, b1_ref, w2_ref, b2_ref, o_ref):
    """Fused FC head: o = relu(x @ w1 + b1) @ w2 + b2 (hidden never leaves VMEM)."""
    x = x_ref[...]
    if x.dtype != jnp.bfloat16:
        x = x.astype(jnp.float32).astype(jnp.bfloat16)
    h = jnp.dot(x, w1_ref[...], preferred_element_type=jnp.float32)
    h = jnp.maximum(h + b1_ref[...], 0.0).astype(w2_ref.dtype)
    q = jnp.dot(h, w2_ref[...], preferred_element_type=jnp.float32)
    o_ref[...] = q + b2_ref[...]


# ----------------------------------------------------------------------------
# Pallas wrappers: M-tiled grid, parallel over M (>=2 tiles -> megacore on v7x)
# ----------------------------------------------------------------------------
def _m_tiling(M):
    """Pick an M tile: >= 2 tiles whenever legal (v7x has 2 TCs), <= TILE_M."""
    if M < 64:                        # too small to split into (8,128)-legal tiles
        return M, 1
    tm = min(TILE_M, _round_up(pl.cdiv(M, 2), 32))
    return tm, pl.cdiv(M, tm)


def pallas_linear(x, w, b, *, relu, out_dtype):
    """x: (M, K) uint8/bf16, w: (K, N) bf16, b: (N,) f32 -> (M, N) out_dtype."""
    M, K = x.shape
    Kw, N = w.shape
    assert K == Kw
    tm, gm = _m_tiling(M)
    kern = functools.partial(_linear_kernel, relu=relu)
    return pl.pallas_call(
        kern,
        out_shape=jax.ShapeDtypeStruct((M, N), out_dtype),
        grid=(gm,),
        in_specs=[
            pl.BlockSpec((tm, K), lambda i: (i, 0)),   # x: tiled over M (native dtype)
            pl.BlockSpec((K, N), lambda i: (0, 0)),    # w: resident
            pl.BlockSpec((1, N), lambda i: (0, 0)),    # bias: resident
        ],
        out_specs=pl.BlockSpec((tm, N), lambda i: (i, 0)),
        compiler_params=pltpu.CompilerParams(
            dimension_semantics=("parallel",),
            vmem_limit_bytes=VMEM_LIMIT_BYTES,
        ),
    )(x, w, b.reshape(1, N).astype(jnp.float32))


def pallas_fc_head(x, w1, b1, w2, b2):
    """Fused relu(x@w1+b1)@w2+b2.  w2/b2 are pre-padded to a 128-lane multiple."""
    M, K = x.shape
    K1, N1 = w1.shape
    N1b, N2 = w2.shape
    assert K == K1 and N1 == N1b
    tm, gm = _m_tiling(M)
    return pl.pallas_call(
        _fc_head_kernel,
        out_shape=jax.ShapeDtypeStruct((M, N2), jnp.float32),
        grid=(gm,),
        in_specs=[
            pl.BlockSpec((tm, K), lambda i: (i, 0)),
            pl.BlockSpec((K, N1), lambda i: (0, 0)),
            pl.BlockSpec((1, N1), lambda i: (0, 0)),
            pl.BlockSpec((N1, N2), lambda i: (0, 0)),
            pl.BlockSpec((1, N2), lambda i: (0, 0)),
        ],
        out_specs=pl.BlockSpec((tm, N2), lambda i: (i, 0)),
        compiler_params=pltpu.CompilerParams(
            dimension_semantics=("parallel",),
            vmem_limit_bytes=VMEM_LIMIT_BYTES,
        ),
    )(x, w1, b1.reshape(1, N1), w2, b2.reshape(1, N2))


# ----------------------------------------------------------------------------
# NHWC conv layer: im2col glue (single concatenate, no transpose) + Pallas matmul
# ----------------------------------------------------------------------------
def conv_layer_nhwc(x, w_mat, b, *, kh, kw, stride):
    """x: (B, H, W, C) uint8/bf16; w_mat: (kh*kw*C, O) bf16; b: (O,) f32."""
    B, H, W, C = x.shape
    oh = (H - kh) // stride + 1
    ow = (W - kw) // stride + 1
    # (i, j) loop order + channel-axis concat already yields (KH, KW, C) column
    # order -> one copy pass, no stack / 6-D transpose round trip.
    cols = [x[:, i:i + stride * oh:stride, j:j + stride * ow:stride, :]
            for i in range(kh) for j in range(kw)]
    p = jnp.concatenate(cols, axis=-1)                # (B, OH, OW, KH*KW*C)
    p = p.reshape(B * oh * ow, kh * kw * C)           # keeps source dtype (uint8 ok)
    y = pallas_linear(p, w_mat, b, relu=True, out_dtype=jnp.bfloat16)
    return y.reshape(B, oh, ow, w_mat.shape[1])       # stay NHWC (no NCHW round trip)


# ----------------------------------------------------------------------------
# Parameter init (torch-layout, PyTorch-default uniform bounds) + one-time prep
# ----------------------------------------------------------------------------
def _uniform(key, shape, bound):
    return jax.random.uniform(key, shape, jnp.float32, -bound, bound)


def _conv_out_hw(H, W):
    h1, w1 = (H - 8) // 4 + 1, (W - 8) // 4 + 1
    h2, w2 = (h1 - 4) // 2 + 1, (w1 - 4) // 2 + 1
    return h2 - 2, w2 - 2


def init_dqn_params(key, input_shape, n_actions):
    c_in, H, W = input_shape
    keys = jax.random.split(key, 10)

    def conv_param(k_w, k_b, cin, cout, k):
        bound = 1.0 / ((cin * k * k) ** 0.5)
        return (_uniform(k_w, (cout, cin, k, k), bound),
                _uniform(k_b, (cout,), bound))

    params = {}
    params["conv1_w"], params["conv1_b"] = conv_param(keys[0], keys[1], c_in, 32, 8)
    params["conv2_w"], params["conv2_b"] = conv_param(keys[2], keys[3], 32, 64, 4)
    params["conv3_w"], params["conv3_b"] = conv_param(keys[4], keys[5], 64, 64, 3)

    h3, w3 = _conv_out_hw(H, W)
    conv_out = 64 * h3 * w3
    b1 = 1.0 / (conv_out ** 0.5)
    params["fc1_w"] = _uniform(keys[6], (512, conv_out), b1)   # torch (out, in)
    params["fc1_b"] = _uniform(keys[7], (512,), b1)
    b2 = 1.0 / (512 ** 0.5)
    params["fc2_w"] = _uniform(keys[8], (n_actions, 512), b2)
    params["fc2_b"] = _uniform(keys[9], (n_actions,), b2)
    return params


def prepare_params(params, input_shape, n_actions):
    """One-time conversion of torch-layout params into kernel-ready layout."""
    _, H, W = input_shape

    def prep_conv(w, b, scale=1.0):
        O, Ci, KH, KW = w.shape
        # torch (O, C, KH, KW) -> rows ordered (KH, KW, C) to match im2col columns
        wm = jnp.transpose(w, (2, 3, 1, 0)).reshape(KH * KW * Ci, O) * scale
        return wm.astype(jnp.bfloat16), b.astype(jnp.float32)

    p = {}
    p["conv1_w"], p["conv1_b"] = prep_conv(params["conv1_w"], params["conv1_b"],
                                           scale=1.0 / 256.0)  # fold x/256 into w
    p["conv2_w"], p["conv2_b"] = prep_conv(params["conv2_w"], params["conv2_b"])
    p["conv3_w"], p["conv3_b"] = prep_conv(params["conv3_w"], params["conv3_b"])

    h3, w3 = _conv_out_hw(H, W)
    conv_out = 64 * h3 * w3

    # fc1: torch columns follow the NCHW flatten (C,H,W); permute once to the
    # NHWC flatten (H,W,C) produced by the kernels, then transpose to (K, 512).
    fc1 = params["fc1_w"].reshape(512, 64, h3, w3)
    fc1 = jnp.transpose(fc1, (0, 2, 3, 1)).reshape(512, conv_out)
    p["fc1_w"] = jnp.transpose(fc1).astype(jnp.bfloat16)
    p["fc1_b"] = params["fc1_b"].astype(jnp.float32)

    # fc2: (n_actions, 512) -> (512, n_pad), zero-padded to a 128-lane multiple
    n_pad = _round_up(n_actions, LANES)
    w2t = jnp.transpose(params["fc2_w"])
    p["fc2_w"] = jnp.pad(w2t, ((0, 0), (0, n_pad - n_actions))).astype(jnp.bfloat16)
    p["fc2_b"] = jnp.pad(params["fc2_b"], (0, n_pad - n_actions)).astype(jnp.float32)
    return p


# ----------------------------------------------------------------------------
# DQN forward (kernel-ready params) and plain-XLA f32 reference
# ----------------------------------------------------------------------------
def dqn_forward(p, x, n_actions):
    """x: (B, C, H, W) raw pixels (uint8, 0..255). Returns (B, n_actions) f32."""
    x = jnp.transpose(x, (0, 2, 3, 1))                 # NCHW -> NHWC, layout only
    h = conv_layer_nhwc(x, p["conv1_w"], p["conv1_b"], kh=8, kw=8, stride=4)
    h = conv_layer_nhwc(h, p["conv2_w"], p["conv2_b"], kh=4, kw=4, stride=2)
    h = conv_layer_nhwc(h, p["conv3_w"], p["conv3_b"], kh=3, kw=3, stride=1)
    flat = h.reshape(h.shape[0], -1)                   # NHWC flatten (fc1_w pre-permuted)
    q = pallas_fc_head(flat, p["fc1_w"], p["fc1_b"], p["fc2_w"], p["fc2_b"])
    return q[:, :n_actions]


def dqn_reference(params, x):
    """Plain-XLA f32 reference with PyTorch semantics (for a sanity check)."""
    x = x.astype(jnp.float32) / 256.0

    def conv(z, w, b, s):
        y = jax.lax.conv_general_dilated(
            z, w, window_strides=(s, s), padding="VALID",
            dimension_numbers=("NCHW", "OIHW", "NCHW"))
        return jax.nn.relu(y + b[None, :, None, None])

    h = conv(x, params["conv1_w"], params["conv1_b"], 4)
    h = conv(h, params["conv2_w"], params["conv2_b"], 2)
    h = conv(h, params["conv3_w"], params["conv3_b"], 1)
    flat = h.reshape(h.shape[0], -1)                   # NCHW flatten (torch .view)
    h1 = jax.nn.relu(flat @ params["fc1_w"].T + params["fc1_b"])
    return h1 @ params["fc2_w"].T + params["fc2_b"]


if __name__ == "__main__":
    # 36 is the smallest spatial size that survives the 8/4 -> 4/2 -> 3/1 stack
    # (final feature map 1x1), so the "small" example is 4x36x36, batch=2.
    input_shape = (4, 36, 36)
    n_actions = 4
    batch = 2

    key = jax.random.PRNGKey(0)
    k_params, k_x = jax.random.split(key)
    params = init_dqn_params(k_params, input_shape, n_actions)
    prepped = prepare_params(params, input_shape, n_actions)

    # uint8 "pixels": the /256 is folded into conv1's weight; the uint8->bf16
    # cast happens inside the conv1 Pallas kernel.
    x = jax.random.randint(k_x, (batch,) + input_shape, 0, 256,
                           jnp.int32).astype(jnp.uint8)

    fwd = jax.jit(dqn_forward, static_argnums=2)
    q = jax.block_until_ready(fwd(prepped, x, n_actions))

    assert q.shape == (batch, n_actions), q.shape
    assert q.dtype == jnp.float32
    assert bool(jnp.all(jnp.isfinite(q)))

    # Loose sanity check vs the f32 reference (small bf16-MXU drift expected).
    q_ref = jax.block_until_ready(jax.jit(dqn_reference)(params, x))
    assert bool(jnp.max(jnp.abs(q - q_ref)) < 5e-2), (q, q_ref)

    print("KERNEL_OK")
</pallas_src>

<mosaic_0001>
module attributes {stable_mosaic.version = 11 : i64} {
  func.func @_linear_kernel(%arg0: i32, %arg1: memref<64x256xi8, #tpu.memory_space<vmem>>, %arg2: memref<256x32xbf16, #tpu.memory_space<vmem>>, %arg3: memref<1x32xf32, #tpu.memory_space<vmem>>, %arg4: memref<64x32xbf16, #tpu.memory_space<vmem>>) attributes {dimension_semantics = [#tpu.dimension_semantics<parallel>], iteration_bounds = array<i64: 2>, scalar_prefetch = 0 : i64, scratch_operands = 0 : i64, tpu.core_type = #tpu.core_type<tc>, window_params = [{transform_indices = @transform_0, window_bounds = array<i64: 64, 256>}, {pipeline_mode = #tpu.pipeline_mode<synchronous>, transform_indices = @transform_1, window_bounds = array<i64: 256, 32>}, {pipeline_mode = #tpu.pipeline_mode<synchronous>, transform_indices = @transform_2, window_bounds = array<i64: 1, 32>}, {transform_indices = @transform_3, window_bounds = array<i64: 64, 32>}]} {
    %c0 = arith.constant 0 : index
    %c0_0 = arith.constant 0 : index
    %0 = vector.load %arg1[%c0, %c0_0] : memref<64x256xi8, #tpu.memory_space<vmem>>, vector<64x256xi8>
    %1 = arith.uitofp %0 : vector<64x256xi8> to vector<64x256xf32>
    %2 = arith.truncf %1 : vector<64x256xf32> to vector<64x256xbf16>
    %c0_1 = arith.constant 0 : index
    %c0_2 = arith.constant 0 : index
    %3 = vector.load %arg2[%c0_1, %c0_2] : memref<256x32xbf16, #tpu.memory_space<vmem>>, vector<256x32xbf16>
    %cst = arith.constant dense<0.000000e+00> : vector<64x32xf32>
    %4 = tpu.matmul %2, %3, %cst {dimension_numbers = #tpu.dot_dimension_numbers<[1], [0], [0], [1], [0, 0, 1, 1], [], []>} : vector<64x256xbf16>, vector<256x32xbf16>, vector<64x32xf32> -> vector<64x32xf32>
    %c0_3 = arith.constant 0 : index
    %c0_4 = arith.constant 0 : index
    %5 = vector.load %arg3[%c0_3, %c0_4] : memref<1x32xf32, #tpu.memory_space<vmem>>, vector<1x32xf32>
    %6 = vector.broadcast %5 : vector<1x32xf32> to vector<64x32xf32>
    %7 = arith.addf %4, %6 : vector<64x32xf32>
    %cst_5 = arith.constant 0.000000e+00 : f32
    %8 = vector.broadcast %cst_5 : f32 to vector<64x32xf32>
    %9 = arith.maximumf %7, %8 : vector<64x32xf32>
    %10 = arith.truncf %9 : vector<64x32xf32> to vector<64x32xbf16>
    %c0_6 = arith.constant 0 : index
    %c0_7 = arith.constant 0 : index
    %11 = vector.load %arg4[%c0_6, %c0_7] : memref<64x32xbf16, #tpu.memory_space<vmem>>, vector<64x32xbf16>
    tpu.vector_store %arg4[%c0_6, %c0_7], %10 {strides = array<i32>} : memref<64x32xbf16, #tpu.memory_space<vmem>>, vector<64x32xbf16>,
    return
  }
  func.func @transform_0(%arg0: i32) -> (i32, i32) {
    %c0_i32 = arith.constant 0 : i32
    %c0_i32_0 = arith.constant 0 : i32
    return %arg0, %c0_i32 : i32, i32
  }
  func.func @transform_1(%arg0: i32) -> (i32, i32) {
    %c0_i32 = arith.constant 0 : i32
    %c0_i32_0 = arith.constant 0 : i32
    %c0_i32_1 = arith.constant 0 : i32
    return %c0_i32, %c0_i32_0 : i32, i32
  }
  func.func @transform_2(%arg0: i32) -> (i32, i32) {
    %c0_i32 = arith.constant 0 : i32
    %c0_i32_0 = arith.constant 0 : i32
    %c0_i32_1 = arith.constant 0 : i32
    return %c0_i32, %c0_i32_0 : i32, i32
  }
  func.func @transform_3(%arg0: i32) -> (i32, i32) {
    %c0_i32 = arith.constant 0 : i32
    %c0_i32_0 = arith.constant 0 : i32
    return %arg0, %c0_i32 : i32, i32
  }
}

module attributes {stable_mosaic.version = 11 : i64} {
  func.func @_linear_kernel(%arg0: i32, %arg1: memref<18x512xbf16, #tpu.memory_space<vmem>>, %arg2: memref<512x64xbf16, #tpu.memory_space<vmem>>, %arg3: memref<1x64xf32, #tpu.memory_space<vmem>>, %arg4: memref<18x64xbf16, #tpu.memory_space<vmem>>) attributes {dimension_semantics = [#tpu.dimension_semantics<parallel>], iteration_bounds = array<i64: 1>, scalar_prefetch = 0 : i64, scratch_operands = 0 : i64, tpu.core_type = #tpu.core_type<tc>, window_params = [{transform_indices = @transform_0, window_bounds = array<i64: 18, 512>}, {pipeline_mode = #tpu.pipeline_mode<synchronous>, transform_indices = @transform_1, window_bounds = array<i64: 512, 64>}, {pipeline_mode = #tpu.pipeline_mode<synchronous>, transform_indices = @transform_2, window_bounds = array<i64: 1, 64>}, {transform_indices = @transform_3, window_bounds = array<i64: 18, 64>}]} {
    %c0 = arith.constant 0 : index
    %c0_0 = arith.constant 0 : index
    %0 = vector.load %arg1[%c0, %c0_0] : memref<18x512xbf16, #tpu.memory_space<vmem>>, vector<18x512xbf16>
    %c0_1 = arith.constant 0 : index
    %c0_2 = arith.constant 0 : index
    %1 = vector.load %arg2[%c0_1, %c0_2] : memref<512x64xbf16, #tpu.memory_space<vmem>>, vector<512x64xbf16>
    %cst = arith.constant dense<0.000000e+00> : vector<18x64xf32>
    %2 = tpu.matmul %0, %1, %cst {dimension_numbers = #tpu.dot_dimension_numbers<[1], [0], [0], [1], [0, 0, 1, 1], [], []>} : vector<18x512xbf16>, vector<512x64xbf16>, vector<18x64xf32> -> vector<18x64xf32>
    %c0_3 = arith.constant 0 : index
    %c0_4 = arith.constant 0 : index
    %3 = vector.load %arg3[%c0_3, %c0_4] : memref<1x64xf32, #tpu.memory_space<vmem>>, vector<1x64xf32>
    %4 = vector.broadcast %3 : vector<1x64xf32> to vector<18x64xf32>
    %5 = arith.addf %2, %4 : vector<18x64xf32>
    %cst_5 = arith.constant 0.000000e+00 : f32
    %6 = vector.broadcast %cst_5 : f32 to vector<18x64xf32>
    %7 = arith.maximumf %5, %6 : vector<18x64xf32>
    %8 = arith.truncf %7 : vector<18x64xf32> to vector<18x64xbf16>
    %c0_6 = arith.constant 0 : index
    %c0_7 = arith.constant 0 : index
    %9 = vector.load %arg4[%c0_6, %c0_7] : memref<18x64xbf16, #tpu.memory_space<vmem>>, vector<18x64xbf16>
    tpu.vector_store %arg4[%c0_6, %c0_7], %8 {strides = array<i32>} : memref<18x64xbf16, #tpu.memory_space<vmem>>, vector<18x64xbf16>,
    return
  }
  func.func @transform_0(%arg0: i32) -> (i32, i32) {
    %c0_i32 = arith.constant 0 : i32
    %c0_i32_0 = arith.constant 0 : i32
    return %arg0, %c0_i32 : i32, i32
  }
  func.func @transform_1(%arg0: i32) -> (i32, i32) {
    %c0_i32 = arith.constant 0 : i32
    %c0_i32_0 = arith.constant 0 : i32
    %c0_i32_1 = arith.constant 0 : i32
    return %c0_i32, %c0_i32_0 : i32, i32
  }
  func.func @transform_2(%arg0: i32) -> (i32, i32) {
    %c0_i32 = arith.constant 0 : i32
    %c0_i32_0 = arith.constant 0 : i32
    %c0_i32_1 = arith.constant 0 : i32
    return %c0_i32, %c0_i32_0 : i32, i32
  }
  func.func @transform_3(%arg0: i32) -> (i32, i32) {
    %c0_i32 = arith.constant 0 : i32
    %c0_i32_0 = arith.constant 0 : i32
    return %arg0, %c0_i32 : i32, i32
  }
}

module attributes {stable_mosaic.version = 11 : i64} {
  func.func @_fc_head_kernel(%arg0: i32, %arg1: memref<2x64xbf16, #tpu.memory_space<vmem>>, %arg2: memref<64x512xbf16, #tpu.memory_space<vmem>>, %arg3: memref<1x512xf32, #tpu.memory_space<vmem>>, %arg4: memref<512x128xbf16, #tpu.memory_space<vmem>>, %arg5: memref<1x128xf32, #tpu.memory_space<vmem>>, %arg6: memref<2x128xf32, #tpu.memory_space<vmem>>) attributes {dimension_semantics = [#tpu.dimension_semantics<parallel>], iteration_bounds = array<i64: 1>, scalar_prefetch = 0 : i64, scratch_operands = 0 : i64, tpu.core_type = #tpu.core_type<tc>, window_params = [{transform_indices = @transform_0, window_bounds = array<i64: 2, 64>}, {pipeline_mode = #tpu.pipeline_mode<synchronous>, transform_indices = @transform_1, window_bounds = array<i64: 64, 512>}, {pipeline_mode = #tpu.pipeline_mode<synchronous>, transform_indices = @transform_2, window_bounds = array<i64: 1, 512>}, {pipeline_mode = #tpu.pipeline_mode<synchronous>, transform_indices = @transform_3, window_bounds = array<i64: 512, 128>}, {pipeline_mode = #tpu.pipeline_mode<synchronous>, transform_indices = @transform_4, window_bounds = array<i64: 1, 128>}, {transform_indices = @transform_5, window_bounds = array<i64: 2, 128>}]} {
    %c0 = arith.constant 0 : index
    %c0_0 = arith.constant 0 : index
    %0 = vector.load %arg1[%c0, %c0_0] : memref<2x64xbf16, #tpu.memory_space<vmem>>, vector<2x64xbf16>
    %c0_1 = arith.constant 0 : index
    %c0_2 = arith.constant 0 : index
    %1 = vector.load %arg2[%c0_1, %c0_2] : memref<64x512xbf16, #tpu.memory_space<vmem>>, vector<64x512xbf16>
    %cst = arith.constant dense<0.000000e+00> : vector<2x512xf32>
    %2 = tpu.matmul %0, %1, %cst {dimension_numbers = #tpu.dot_dimension_numbers<[1], [0], [0], [1], [0, 0, 1, 1], [], []>} : vector<2x64xbf16>, vector<64x512xbf16>, vector<2x512xf32> -> vector<2x512xf32>
    %c0_3 = arith.constant 0 : index
    %c0_4 = arith.constant 0 : index
    %3 = vector.load %arg3[%c0_3, %c0_4] : memref<1x512xf32, #tpu.memory_space<vmem>>, vector<1x512xf32>
    %4 = vector.broadcast %3 : vector<1x512xf32> to vector<2x512xf32>
    %5 = arith.addf %2, %4 : vector<2x512xf32>
    %cst_5 = arith.constant 0.000000e+00 : f32
    %6 = vector.broadcast %cst_5 : f32 to vector<2x512xf32>
    %7 = arith.maximumf %5, %6 : vector<2x512xf32>
    %8 = arith.truncf %7 : vector<2x512xf32> to vector<2x512xbf16>
    %c0_6 = arith.constant 0 : index
    %c0_7 = arith.constant 0 : index
    %9 = vector.load %arg4[%c0_6, %c0_7] : memref<512x128xbf16, #tpu.memory_space<vmem>>, vector<512x128xbf16>
    %cst_8 = arith.constant dense<0.000000e+00> : vector<2x128xf32>
    %10 = tpu.matmul %8, %9, %cst_8 {dimension_numbers = #tpu.dot_dimension_numbers<[1], [0], [0], [1], [0, 0, 1, 1], [], []>} : vector<2x512xbf16>, vector<512x128xbf16>, vector<2x128xf32> -> vector<2x128xf32>
    %c0_9 = arith.constant 0 : index
    %c0_10 = arith.constant 0 : index
    %11 = vector.load %arg5[%c0_9, %c0_10] : memref<1x128xf32, #tpu.memory_space<vmem>>, vector<1x128xf32>
    %12 = vector.broadcast %11 : vector<1x128xf32> to vector<2x128xf32>
    %13 = arith.addf %10, %12 : vector<2x128xf32>
    %c0_11 = arith.constant 0 : index
    %c0_12 = arith.constant 0 : index
    %14 = vector.load %arg6[%c0_11, %c0_12] : memref<2x128xf32, #tpu.memory_space<vmem>>, vector<2x128xf32>
    tpu.vector_store %arg6[%c0_11, %c0_12], %13 {strides = array<i32>} : memref<2x128xf32, #tpu.memory_space<vmem>>, vector<2x128xf32>,
    return
  }
  func.func @transform_0(%arg0: i32) -> (i32, i32) {
    %c0_i32 = arith.constant 0 : i32
    %c0_i32_0 = arith.constant 0 : i32
    return %arg0, %c0_i32 : i32, i32
  }
  func.func @transform_1(%arg0: i32) -> (i32, i32) {
    %c0_i32 = arith.constant 0 : i32
    %c0_i32_0 = arith.constant 0 : i32
    %c0_i32_1 = arith.constant 0 : i32
    return %c0_i32, %c0_i32_0 : i32, i32
  }
  func.func @transform_2(%arg0: i32) -> (i32, i32) {
    %c0_i32 = arith.constant 0 : i32
    %c0_i32_0 = arith.constant 0 : i32
    %c0_i32_1 = arith.constant 0 : i32
    return %c0_i32, %c0_i32_0 : i32, i32
  }
  func.func @transform_3(%arg0: i32) -> (i32, i32) {
    %c0_i32 = arith.constant 0 : i32
    %c0_i32_0 = arith.constant 0 : i32
    %c0_i32_1 = arith.constant 0 : i32
    return %c0_i32, %c0_i32_0 : i32, i32
  }
  func.func @transform_4(%arg0: i32) -> (i32, i32) {
    %c0_i32 = arith.constant 0 : i32
    %c0_i32_0 = arith.constant 0 : i32
    %c0_i32_1 = arith.constant 0 : i32
    return %c0_i32, %c0_i32_0 : i32, i32
  }
  func.func @transform_5(%arg0: i32) -> (i32, i32) {
    %c0_i32 = arith.constant 0 : i32
    %c0_i32_0 = arith.constant 0 : i32
    return %arg0, %c0_i32 : i32, i32
  }
}

module attributes {stable_mosaic.version = 11 : i64} {
  func.func @_linear_kernel(%arg0: i32, %arg1: memref<2x576xbf16, #tpu.memory_space<vmem>>, %arg2: memref<576x64xbf16, #tpu.memory_space<vmem>>, %arg3: memref<1x64xf32, #tpu.memory_space<vmem>>, %arg4: memref<2x64xbf16, #tpu.memory_space<vmem>>) attributes {dimension_semantics = [#tpu.dimension_semantics<parallel>], iteration_bounds = array<i64: 1>, scalar_prefetch = 0 : i64, scratch_operands = 0 : i64, tpu.core_type = #tpu.core_type<tc>, window_params = [{transform_indices = @transform_0, window_bounds = array<i64: 2, 576>}, {pipeline_mode = #tpu.pipeline_mode<synchronous>, transform_indices = @transform_1, window_bounds = array<i64: 576, 64>}, {pipeline_mode = #tpu.pipeline_mode<synchronous>, transform_indices = @transform_2, window_bounds = array<i64: 1, 64>}, {transform_indices = @transform_3, window_bounds = array<i64: 2, 64>}]} {
    %c0 = arith.constant 0 : index
    %c0_0 = arith.constant 0 : index
    %0 = vector.load %arg1[%c0, %c0_0] : memref<2x576xbf16, #tpu.memory_space<vmem>>, vector<2x576xbf16>
    %c0_1 = arith.constant 0 : index
    %c0_2 = arith.constant 0 : index
    %1 = vector.load %arg2[%c0_1, %c0_2] : memref<576x64xbf16, #tpu.memory_space<vmem>>, vector<576x64xbf16>
    %cst = arith.constant dense<0.000000e+00> : vector<2x64xf32>
    %2 = tpu.matmul %0, %1, %cst {dimension_numbers = #tpu.dot_dimension_numbers<[1], [0], [0], [1], [0, 0, 1, 1], [], []>} : vector<2x576xbf16>, vector<576x64xbf16>, vector<2x64xf32> -> vector<2x64xf32>
    %c0_3 = arith.constant 0 : index
    %c0_4 = arith.constant 0 : index
    %3 = vector.load %arg3[%c0_3, %c0_4] : memref<1x64xf32, #tpu.memory_space<vmem>>, vector<1x64xf32>
    %4 = vector.broadcast %3 : vector<1x64xf32> to vector<2x64xf32>
    %5 = arith.addf %2, %4 : vector<2x64xf32>
    %cst_5 = arith.constant 0.000000e+00 : f32
    %6 = vector.broadcast %cst_5 : f32 to vector<2x64xf32>
    %7 = arith.maximumf %5, %6 : vector<2x64xf32>
    %8 = arith.truncf %7 : vector<2x64xf32> to vector<2x64xbf16>
    %c0_6 = arith.constant 0 : index
    %c0_7 = arith.constant 0 : index
    %9 = vector.load %arg4[%c0_6, %c0_7] : memref<2x64xbf16, #tpu.memory_space<vmem>>, vector<2x64xbf16>
    tpu.vector_store %arg4[%c0_6, %c0_7], %8 {strides = array<i32>} : memref<2x64xbf16, #tpu.memory_space<vmem>>, vector<2x64xbf16>,
    return
  }
  func.func @transform_0(%arg0: i32) -> (i32, i32) {
    %c0_i32 = arith.constant 0 : i32
    %c0_i32_0 = arith.constant 0 : i32
    return %arg0, %c0_i32 : i32, i32
  }
  func.func @transform_1(%arg0: i32) -> (i32, i32) {
    %c0_i32 = arith.constant 0 : i32
    %c0_i32_0 = arith.constant 0 : i32
    %c0_i32_1 = arith.constant 0 : i32
    return %c0_i32, %c0_i32_0 : i32, i32
  }
  func.func @transform_2(%arg0: i32) -> (i32, i32) {
    %c0_i32 = arith.constant 0 : i32
    %c0_i32_0 = arith.constant 0 : i32
    %c0_i32_1 = arith.constant 0 : i32
    return %c0_i32, %c0_i32_0 : i32, i32
  }
  func.func @transform_3(%arg0: i32) -> (i32, i32) {
    %c0_i32 = arith.constant 0 : i32
    %c0_i32_0 = arith.constant 0 : i32
    return %arg0, %c0_i32 : i32, i32
  }
}

</mosaic_0001>

<llo_original>
// kernel: dqn_forward.4
$region0: #{dqn_forward.4}
  #allocation0 [shape = 'u32[]', space=smem, size = 0x4, offset = 0x4, fixed_abs, tag = 'smem constant byte address 0x4 - core index']
  #allocation1 [shape = 'u32[72,128]{1,0:T(1,128)}', space=vmem, size = 0x9000, scoped, tag = 'internal scratch']
  %s0 = inlined_call_operand.vmem [shape: u8[128,256], index: 0, kind: input, shape index: {}]
  %s1 = inlined_call_operand.vmem [shape: bf16[256,32], index: 1, kind: input, shape index: {}]
  %s2 = inlined_call_operand.vmem [shape: f32[1,32], index: 2, kind: input, shape index: {}]
  %s3 = inlined_call_operand.vmem [shape: bf16[128,32], index: 3, kind: output, shape index: {}]
  %s4 = sld [smem:[#allocation0]]
  $region45: #{dqn_forward.4} parent=0
    _
  %s6 = ssub.s32 1, %s4
  %s7 = scalar_select 0, %s6, %s4
  loop: start=0, step=1, limit=4
  $region2: #{dqn_forward.4} parent=0 // loop_pre_header
    _
  $region3: #{dqn_forward.4} parent=0 // loop_header
    %s9 = sphi 0, %s13
    %p10 = scmp.ge.s32.totalorder %s9, 4
    %s19 = sphi 0, %s21
    %s22 = sphi 0, %s19
    %s23 = sphi 0, %s22
    %s39 = sphi 0, %s23
    %s43 = sphi 0, %s43
    %s45 = sphi 0, %s43
    %s46 = sphi 0, %s45
    %s60 = sphi 0, %s46
    %s64 = sphi 0, %s64
    %s66 = sphi 0, %s64
    %s67 = sphi 0, %s66
    %s81 = sphi 0, %s67
    %s87 = sphi 0, %s89
    %s90 = sphi 0, %s87
    %s91 = sphi 0, %s90
    %s107 = sphi 0, %s91
  $region4: #{dqn_forward.4} parent=0 // loop_header_branch
    %12 = sbr.rel (%p10) target = $region8
  $region5: #{dqn_forward.4} parent=0 // loop_body
    %s14 = ssub.s32 %s9, 1
    %s15 = ssub.s32 %s9, 2
    %s16 = sadd.s32 %s9, 1
    %s17 = ssub.s32 %s9, %s16
    %p18 = scmp.eq.s32.totalorder %s17, 0
    %s20 = sadd.s32 %s19, 1
    %s21 = scalar_select %p18, %s19, %s20
    %p24 = pneg %p18
    %p25 = scmp.eq.s32.totalorder %s9, 1
    %p26 = por %p24, %p25
    %p27 = scmp.ne.s32.totalorder %s19, %s22
    %p28 = scmp.eq.s32.totalorder %s9, 0
    %p29 = por %p27, %p28
    %p30 = scmp.ne.s32.totalorder %s19, %s22
    %p31 = scmp.eq.s32.totalorder %s14, 1
    %p32 = por %p30, %p31
    %p33 = scmp.ne.s32.totalorder %s22, %s23
    %p34 = scmp.eq.s32.totalorder %s14, 0
    %p35 = por %p33, %p34
    %p36 = scmp.ne.s32.totalorder %s22, %s23
    %p37 = scmp.eq.s32.totalorder %s15, 1
    %p38 = por %p36, %p37
    %p40 = scmp.ne.s32.totalorder %s23, %s39
    %p41 = scmp.eq.s32.totalorder %s15, 0
    %p42 = por %p40, %p41
    %s44 = sadd.s32 %s43, 1
    %p47 = scmp.eq.s32.totalorder %s9, 1
    %p48 = scmp.ne.s32.totalorder %s43, %s45
    %p49 = scmp.eq.s32.totalorder %s9, 0
    %p50 = por %p48, %p49
    %p51 = scmp.ne.s32.totalorder %s43, %s45
    %p52 = scmp.eq.s32.totalorder %s14, 1
    %p53 = por %p51, %p52
    %p54 = scmp.ne.s32.totalorder %s45, %s46
    %p55 = scmp.eq.s32.totalorder %s14, 0
    %p56 = por %p54, %p55
    %p57 = scmp.ne.s32.totalorder %s45, %s46
    %p58 = scmp.eq.s32.totalorder %s15, 1
    %p59 = por %p57, %p58
    %p61 = scmp.ne.s32.totalorder %s46, %s60
    %p62 = scmp.eq.s32.totalorder %s15, 0
    %p63 = por %p61, %p62
    %s65 = sadd.s32 %s64, 1
    %p68 = scmp.eq.s32.totalorder %s9, 1
    %p69 = scmp.ne.s32.totalorder %s64, %s66
    %p70 = scmp.eq.s32.totalorder %s9, 0
    %p71 = por %p69, %p70
    %p72 = scmp.ne.s32.totalorder %s64, %s66
    %p73 = scmp.eq.s32.totalorder %s14, 1
    %p74 = por %p72, %p73
    %p75 = scmp.ne.s32.totalorder %s66, %s67
    %p76 = scmp.eq.s32.totalorder %s14, 0
    %p77 = por %p75, %p76
    %p78 = scmp.ne.s32.totalorder %s66, %s67
    %p79 = scmp.eq.s32.totalorder %s15, 1
    %p80 = por %p78, %p79
    %p82 = scmp.ne.s32.totalorder %s67, %s81
    %p83 = scmp.eq.s32.totalorder %s15, 0
    %p84 = por %p82, %p83
    %s85 = ssub.s32 %s9, %s16
    %p86 = scmp.eq.s32.totalorder %s85, 0
    %s88 = sadd.s32 %s87, 1
    %s89 = scalar_select %p86, %s87, %s88
    %p92 = pneg %p86
    %p93 = scmp.eq.s32.totalorder %s9, 1
    %p94 = por %p92, %p93
    %p95 = scmp.ne.s32.totalorder %s87, %s90
    %p96 = scmp.eq.s32.totalorder %s9, 0
    %p97 = por %p95, %p96
    %p98 = scmp.ne.s32.totalorder %s87, %s90
    %p99 = scmp.eq.s32.totalorder %s14, 1
    %p100 = por %p98, %p99
    %p101 = scmp.ne.s32.totalorder %s90, %s91
    %p102 = scmp.eq.s32.totalorder %s14, 0
    %p103 = por %p101, %p102
    %p104 = scmp.ne.s32.totalorder %s90, %s91
    %p105 = scmp.eq.s32.totalorder %s15, 1
    %p106 = por %p104, %p105
    %p108 = scmp.ne.s32.totalorder %s91, %s107
    %p109 = scmp.eq.s32.totalorder %s15, 0
    %p110 = por %p108, %p109
    %p111 = scmp.le.s32.totalorder 1, %s9
    %p112 = scmp.lt.s32.totalorder %s9, 3
    %p113 = pnand %p111, %p112
    %p114 = pneg %p113
    // Predicated region
    $region9: #{dqn_forward.4} parent=5 // pred_check
      _
    $region10: #{dqn_forward.4} parent=5 // pred_check_branch
      %116 = sbr.rel (%p113) target = $region12
    $region11: #{dqn_forward.4} parent=5 // pred_region
      %s117 = ssub.s32 %s9, 1
      // Predicated region
      $region13: #{dqn_forward.4} parent=11 // pred_check
        %p118 = pneg %p56
      $region14: #{dqn_forward.4} parent=11 // pred_check_branch
        %120 = sbr.rel (%p118) target = $region16
      $region15: #{dqn_forward.4} parent=11 // pred_region
        _
      $region16: #{dqn_forward.4} parent=11 // pred_fallthru
        _
      // Predicated region
      $region17: #{dqn_forward.4} parent=11 // pred_check
        %p121 = pneg %p77
      $region18: #{dqn_forward.4} parent=11 // pred_check_branch
        %123 = sbr.rel (%p121) target = $region20
      $region19: #{dqn_forward.4} parent=11 // pred_region
        _
      $region20: #{dqn_forward.4} parent=11 // pred_fallthru
        _
    $region12: #{dqn_forward.4} parent=5 // pred_fallthru
      _
    %p124 = scmp.lt.s32.totalorder %s9, 2
    // Predicated region
    $region21: #{dqn_forward.4} parent=5 // pred_check
      %p125 = pneg %p124
    $region22: #{dqn_forward.4} parent=5 // pred_check_branch
      %127 = sbr.rel (%p125) target = $region24
    $region23: #{dqn_forward.4} parent=5 // pred_region
      // Predicated region
      $region25: #{dqn_forward.4} parent=23 // pred_check
        %p128 = pneg %p29
      $region26: #{dqn_forward.4} parent=23 // pred_check_branch
        %130 = sbr.rel (%p128) target = $region28
      $region27: #{dqn_forward.4} parent=23 // pred_region
        %s131 = smul.u32 8, %s9
        %p132 = scmp.lt.s32.totalorder %s131, 15
        %s133 = scalar_select %p132, %s131, 15
        %s134 = smul.addr %s133, 2
        %s135 = smul.addr %s134, 2
        %s136 = scalar_lea.vmem %s0, %s135
        %s137 = smul.u32 8, %s9
      $region28: #{dqn_forward.4} parent=23 // pred_fallthru
        _
    $region24: #{dqn_forward.4} parent=5 // pred_fallthru
      _
    %p138 = scmp.le.s32.totalorder 1, %s9
    %p139 = scmp.lt.s32.totalorder %s9, 3
    %p140 = pnand %p138, %p139
    %p141 = pneg %p140
    // Predicated region
    $region29: #{dqn_forward.4} parent=5 // pred_check
      _
    $region30: #{dqn_forward.4} parent=5 // pred_check_branch
      %143 = sbr.rel (%p140) target = $region32
    $region31: #{dqn_forward.4} parent=5 // pred_region
      %s144 = ssub.s32 %s9, 1
      %s145 = smul.u32 8, %s14
      %p146 = scmp.lt.s32.totalorder %s145, 15
      %s147 = scalar_select %p146, %s145, 15
      %s148 = smul.addr %s147, 2
      %s149 = smul.addr %s148, 2
      %s150 = scalar_lea.vmem %s0, %s149
      %p151 = pneg %p35
      %p152 = pneg %p32
      %p153 = pneg %p56
      %p154 = pneg %p53
      %p155 = pneg %p77
      %p156 = pneg %p74
      %p157 = pneg %p103
      %p158 = pneg %p100
      %s159 = smul.u32 8, %s14
      %p160 = scmp.lt.s32.totalorder %s159, 15
      %s161 = scalar_select %p160, %s159, 15
      %s162 = smul.addr %s161, 4
      %s163 = scalar_lea.vmem %s3, %s162
      %s164 = smul.u32 8, %s14
      %p165 = scmp.lt.s32.totalorder %s164, 15
      %s166 = scalar_select %p165, %s164, 15
      %s167 = smul.addr %s166, 2
      %s168 = smul.addr %s167, 2
      %s169 = scalar_lea.vmem %s0, %s168
      %s170 = smul.u32 8, %s14
      %s171 = smul.u32 8, %s14
      %p172 = scmp.lt.s32.totalorder %s171, 15
      %s173 = scalar_select %p172, %s171, 15
      %s174 = smul.addr %s173, 4
      %s175 = scalar_lea.vmem %s3, %s174
      %s176 = smul.u32 8, %s14
      %v177 = vld [vmem:[%s169] sm:$0xf]
      %v178 = vld [vmem:[%s169 + $0x4] sm:$0xf]
      %v179 = vld [vmem:[%s169 + $0x8] sm:$0xf]
      %v180 = vld [vmem:[%s169 + $0xc] sm:$0xf]
      %v181 = vld [vmem:[%s169 + $0x10] sm:$0xf]
      %v182 = vld [vmem:[%s169 + $0x14] sm:$0xf]
      %v183 = vld [vmem:[%s169 + $0x18] sm:$0xf]
      %v184 = vld [vmem:[%s169 + $0x1c] sm:$0xf]
      %v185 = vunpack.c.0.s8 %v177
      %v186 = vunpack.c.1.s8 %v177
      %v187 = vunpack.c.0.s8 %v178
      %v188 = vunpack.c.1.s8 %v178
      %v189 = vunpack.c.0.s8 %v179
      %v190 = vunpack.c.1.s8 %v179
      %v191 = vunpack.c.0.s8 %v180
      %v192 = vunpack.c.1.s8 %v180
      %v193 = vunpack.c.0.s8 %v181
      %v194 = vunpack.c.1.s8 %v181
      %v195 = vunpack.c.0.s8 %v182
      %v196 = vunpack.c.1.s8 %v182
      %v197 = vunpack.c.0.s8 %v183
      %v198 = vunpack.c.1.s8 %v183
      %v199 = vunpack.c.0.s8 %v184
      %v200 = vunpack.c.1.s8 %v184
      %v201 = vand.u32 %v185, 255
      %v202 = vand.u32 %v186, 255
      %v203 = vand.u32 %v187, 255
      %v204 = vand.u32 %v188, 255
      %v205 = vand.u32 %v189, 255
      %v206 = vand.u32 %v190, 255
      %v207 = vand.u32 %v191, 255
      %v208 = vand.u32 %v192, 255
      %v209 = vand.u32 %v193, 255
      %v210 = vand.u32 %v194, 255
      %v211 = vand.u32 %v195, 255
      %v212 = vand.u32 %v196, 255
      %v213 = vand.u32 %v197, 255
      %v214 = vand.u32 %v198, 255
      %v215 = vand.u32 %v199, 255
      %v216 = vand.u32 %v200, 255
      %v217 = vcvt.s32.f32 %v201
      %v218 = vcvt.s32.f32 %v202
      %v219 = vcvt.s32.f32 %v203
      %v220 = vcvt.s32.f32 %v204
      %v221 = vcvt.s32.f32 %v205
      %v222 = vcvt.s32.f32 %v206
      %v223 = vcvt.s32.f32 %v207
      %v224 = vcvt.s32.f32 %v208
      %v225 = vcvt.s32.f32 %v209
      %v226 = vcvt.s32.f32 %v210
      %v227 = vcvt.s32.f32 %v211
      %v228 = vcvt.s32.f32 %v212
      %v229 = vcvt.s32.f32 %v213
      %v230 = vcvt.s32.f32 %v214
      %v231 = vcvt.s32.f32 %v215
      %v232 = vcvt.s32.f32 %v216
      %v233 = vpack.c.bf16 %v219, %v217
      %v234 = vpack.c.bf16 %v220, %v218
      %v235 = vpack.c.bf16 %v223, %v221
      %v236 = vpack.c.bf16 %v224, %v222
      %v237 = vpack.c.bf16 %v227, %v225
      %v238 = vpack.c.bf16 %v228, %v226
      %v239 = vpack.c.bf16 %v231, %v229
      %v240 = vpack.c.bf16 %v232, %v230
      %v241 = vld [vmem:[%s1] sm:$0xf]
      %v242 = vld [vmem:[%s1 + $0x4] sm:$0xf]
      %v243 = vld [vmem:[%s1 + $0x8] sm:$0xf]
      %v244 = vld [vmem:[%s1 + $0xc] sm:$0xf]
      %v245 = vld [vmem:[%s1 + $0x10] sm:$0xf]
      %v246 = vld [vmem:[%s1 + $0x14] sm:$0xf]
      %v247 = vld [vmem:[%s1 + $0x18] sm:$0xf]
      %v248 = vld [vmem:[%s1 + $0x1c] sm:$0xf]
      %v249 = vld [vmem:[%s1 + $0x20] sm:$0xf]
      %v250 = vld [vmem:[%s1 + $0x24] sm:$0xf]
      %v251 = vld [vmem:[%s1 + $0x28] sm:$0xf]
      %v252 = vld [vmem:[%s1 + $0x2c] sm:$0xf]
      %v253 = vld [vmem:[%s1 + $0x30] sm:$0xf]
      %v254 = vld [vmem:[%s1 + $0x34] sm:$0xf]
      %v255 = vld [vmem:[%s1 + $0x38] sm:$0xf]
      %v256 = vld [vmem:[%s1 + $0x3c] sm:$0xf]
      %v257 = vld [vmem:[%s1 + $0x40] sm:$0xf]
      %v258 = vld [vmem:[%s1 + $0x44] sm:$0xf]
      %v259 = vld [vmem:[%s1 + $0x48] sm:$0xf]
      %v260 = vld [vmem:[%s1 + $0x4c] sm:$0xf]
      %v261 = vld [vmem:[%s1 + $0x50] sm:$0xf]
      %v262 = vld [vmem:[%s1 + $0x54] sm:$0xf]
      %v263 = vld [vmem:[%s1 + $0x58] sm:$0xf]
      %v264 = vld [vmem:[%s1 + $0x5c] sm:$0xf]
      %v265 = vld [vmem:[%s1 + $0x60] sm:$0xf]
      %v266 = vld [vmem:[%s1 + $0x64] sm:$0xf]
      %v267 = vld [vmem:[%s1 + $0x68] sm:$0xf]
      %v268 = vld [vmem:[%s1 + $0x6c] sm:$0xf]
      %v269 = vld [vmem:[%s1 + $0x70] sm:$0xf]
      %v270 = vld [vmem:[%s1 + $0x74] sm:$0xf]
      %v271 = vld [vmem:[%s1 + $0x78] sm:$0xf]
      %v272 = vld [vmem:[%s1 + $0x7c] sm:$0xf]
      %v273 = vld [vmem:[%s2] sm:$0x1]
      %v275 = vperm.slane %v273, 0
      %v309 = vunpack.c.l.b16 %v241
      %v310 = vunpack.c.l.b16 %v242
      %v311 = vunpack.c.l.b16 %v243
      %v312 = vunpack.c.l.b16 %v244
      %v313 = vunpack.c.l.b16 %v245
      %v314 = vunpack.c.l.b16 %v246
      %v315 = vunpack.c.l.b16 %v247
      %v316 = vunpack.c.l.b16 %v248
      %v317 = vunpack.c.l.b16 %v249
      %v318 = vunpack.c.l.b16 %v250
      %v319 = vunpack.c.l.b16 %v251
      %v320 = vunpack.c.l.b16 %v252
      %v321 = vunpack.c.l.b16 %v253
      %v322 = vunpack.c.l.b16 %v254
      %v323 = vunpack.c.l.b16 %v255
      %v324 = vunpack.c.l.b16 %v256
      %v325 = vunpack.c.l.b16 %v257
      %v326 = vunpack.c.l.b16 %v258
      %v327 = vunpack.c.l.b16 %v259
      %v328 = vunpack.c.l.b16 %v260
      %v329 = vunpack.c.l.b16 %v261
      %v330 = vunpack.c.l.b16 %v262
      %v331 = vunpack.c.l.b16 %v263
      %v332 = vunpack.c.l.b16 %v264
      %v333 = vunpack.c.l.b16 %v265
      %v334 = vunpack.c.l.b16 %v266
      %v335 = vunpack.c.l.b16 %v267
      %v336 = vunpack.c.l.b16 %v268
      %v337 = vunpack.c.l.b16 %v269
      %v338 = vunpack.c.l.b16 %v270
      %v339 = vunpack.c.l.b16 %v271
      %v340 = vunpack.c.l.b16 %v272
      %v341 = vpack.c.b16 %v310, %v309
      %v342 = vpack.c.b16 %v312, %v311
      %v343 = vpack.c.b16 %v314, %v313
      %v344 = vpack.c.b16 %v316, %v315
      %v345 = vpack.c.b16 %v318, %v317
      %v346 = vpack.c.b16 %v320, %v319
      %v347 = vpack.c.b16 %v322, %v321
      %v348 = vpack.c.b16 %v324, %v323
      %v349 = vpack.c.b16 %v326, %v325
      %v350 = vpack.c.b16 %v328, %v327
      %v351 = vpack.c.b16 %v330, %v329
      %v352 = vpack.c.b16 %v332, %v331
      %v353 = vpack.c.b16 %v334, %v333
      %v354 = vpack.c.b16 %v336, %v335
      %v355 = vpack.c.b16 %v338, %v337
      %v356 = vpack.c.b16 %v340, %v339
      %373 = vmatpush.bf16.msra.mxu0 %v348
      %374 = vmatpush.bf16.msra.mxu0 %v347
      %375 = vmatpush.bf16.msra.mxu0 %v346
      %376 = vmatpush.bf16.msra.mxu0 %v345
      %377 = vmatpush.bf16.msra.mxu0 %v344
      %378 = vmatpush.bf16.msra.mxu0 %v343
      %379 = vmatpush.bf16.msra.mxu0 %v342
      %380 = vmatpush.bf16.msra.mxu0 %v341
      %381 = vmatmul.bf16.gmra.mxu0 %v233
      %v382 = vpop.f32.mrf.mxu0
      %v383 = vadd.f32 %v275, %v382
      %v384 = vpop.f32.mrf.mxu0
      %v385 = vadd.f32 %v275, %v384
      %386 = vmatmul.bf16.gmra.mxu0 %v235
      %v387 = vpop.f32.mrf.mxu0
      %v388 = vadd.f32 %v275, %v387
      %v389 = vpop.f32.mrf.mxu0
      %v390 = vadd.f32 %v275, %v389
      %391 = vmatmul.bf16.gmra.mxu0 %v237
      %v392 = vpop.f32.mrf.mxu0
      %v393 = vadd.f32 %v275, %v392
      %v394 = vpop.f32.mrf.mxu0
      %v395 = vadd.f32 %v275, %v394
      %396 = vmatmul.bf16.gmra.mxu0 %v239
      %v397 = vpop.f32.mrf.mxu0
      %v398 = vadd.f32 %v275, %v397
      %v399 = vpop.f32.mrf.mxu0
      %v400 = vadd.f32 %v275, %v399
      %401 = vdwg.mxu0
      %402 = vmatpush.bf16.msra.mxu0 %v356
      %403 = vmatpush.bf16.msra.mxu0 %v355
      %404 = vmatpush.bf16.msra.mxu0 %v354
      %405 = vmatpush.bf16.msra.mxu0 %v353
      %406 = vmatpush.bf16.msra.mxu0 %v352
      %407 = vmatpush.bf16.msra.mxu0 %v351
      %408 = vmatpush.bf16.msra.mxu0 %v350
      %409 = vmatpush.bf16.msra.mxu0 %v349
      %410 = vmatmul.bf16.gmra.mxu0 %v234
      %v411 = vpop.f32.mrf.mxu0
      %v412 = vadd.f32 %v383, %v411
      %v413 = vpop.f32.mrf.mxu0
      %v414 = vadd.f32 %v385, %v413
      %415 = vmatmul.bf16.gmra.mxu0 %v236
      %v416 = vpop.f32.mrf.mxu0
      %v417 = vadd.f32 %v388, %v416
      %v418 = vpop.f32.mrf.mxu0
      %v419 = vadd.f32 %v390, %v418
      %420 = vmatmul.bf16.gmra.mxu0 %v238
      %v421 = vpop.f32.mrf.mxu0
      %v422 = vadd.f32 %v393, %v421
      %v423 = vpop.f32.mrf.mxu0
      %v424 = vadd.f32 %v395, %v423
      %425 = vmatmul.bf16.gmra.mxu0 %v240
      %v426 = vpop.f32.mrf.mxu0
      %v427 = vadd.f32 %v398, %v426
      %v428 = vpop.f32.mrf.mxu0
      %v429 = vadd.f32 %v400, %v428
      %430 = vdwg.mxu0
      %v431 = vmax.f32 %v412, 0.0
      %v432 = vmax.f32 %v414, 0.0
      %v433 = vmax.f32 %v417, 0.0
      %v434 = vmax.f32 %v419, 0.0
      %v435 = vmax.f32 %v422, 0.0
      %v436 = vmax.f32 %v424, 0.0
      %v437 = vmax.f32 %v427, 0.0
      %v438 = vmax.f32 %v429, 0.0
      %v439 = vpack.c.bf16 %v431, %v431
      %v440 = vpack.c.bf16 %v432, %v432
      %v441 = vpack.c.bf16 %v433, %v433
      %v442 = vpack.c.bf16 %v434, %v434
      %v443 = vpack.c.bf16 %v435, %v435
      %v444 = vpack.c.bf16 %v436, %v436
      %v445 = vpack.c.bf16 %v437, %v437
      %v446 = vpack.c.bf16 %v438, %v438
      %vm447 = vcmask 257024
      %448 = vst.msk [vmem:[%s175] sm:$0xf] %vm447, %v439
      %449 = vst.msk [vmem:[%s175 + $0x4] sm:$0xf] %vm447, %v440
      %450 = vst.msk [vmem:[%s175 + $0x8] sm:$0xf] %vm447, %v441
      %451 = vst.msk [vmem:[%s175 + $0xc] sm:$0xf] %vm447, %v442
      %452 = vst.msk [vmem:[%s175 + $0x10] sm:$0xf] %vm447, %v443
      %453 = vst.msk [vmem:[%s175 + $0x14] sm:$0xf] %vm447, %v444
      %454 = vst.msk [vmem:[%s175 + $0x18] sm:$0xf] %vm447, %v445
      %455 = vst.msk [vmem:[%s175 + $0x1c] sm:$0xf] %vm447, %v446
      %s456 = smul.u32 8, %s14
      %p457 = scmp.lt.s32.totalorder %s456, 15
      %s458 = scalar_select %p457, %s456, 15
      %s459 = smul.addr %s458, 4
      %s460 = scalar_lea.vmem %s3, %s459
      // Predicated region
      $region33: #{dqn_forward.4} parent=31 // pred_check
        %p461 = pneg %p100
      $region34: #{dqn_forward.4} parent=31 // pred_check_branch
        %463 = sbr.rel (%p461) target = $region36
      $region35: #{dqn_forward.4} parent=31 // pred_region
        %s464 = smul.u32 8, %s14
      $region36: #{dqn_forward.4} parent=31 // pred_fallthru
        _
    $region32: #{dqn_forward.4} parent=5 // pred_fallthru
      _
    %p465 = scmp.le.s32.totalorder 2, %s9
    // Predicated region
    $region37: #{dqn_forward.4} parent=5 // pred_check
      %p466 = pneg %p465
    $region38: #{dqn_forward.4} parent=5 // pred_check_branch
      %468 = sbr.rel (%p466) target = $region40
    $region39: #{dqn_forward.4} parent=5 // pred_region
      %s469 = ssub.s32 %s9, 2
      // Predicated region
      $region41: #{dqn_forward.4} parent=39 // pred_check
        %p470 = pneg %p106
      $region42: #{dqn_forward.4} parent=39 // pred_check_branch
        %472 = sbr.rel (%p470) target = $region44
      $region43: #{dqn_forward.4} parent=39 // pred_region
        %s473 = smul.u32 8, %s15
        %p474 = scmp.lt.s32.totalorder %s473, 15
        %s475 = scalar_select %p474, %s473, 15
        %s476 = smul.addr %s475, 4
        %s477 = scalar_lea.vmem %s3, %s476
      $region44: #{dqn_forward.4} parent=39 // pred_fallthru
        _
    $region40: #{dqn_forward.4} parent=5 // pred_fallthru
      _
  $region6: #{dqn_forward.4} parent=0 // loop_footer
    %s13 = sadd.s32 1, %s9
  $region7: #{dqn_forward.4} parent=0 // loop_footer_branch
    %8 = sbr.rel target = $region3
  $region8: #{dqn_forward.4} parent=0 // loop_exit
    _

// kernel: dqn_forward.5
$region0: #{dqn_forward.5}
  #allocation0 [shape = 'u32[]', space=smem, size = 0x4, offset = 0x4, fixed_abs, tag = 'smem constant byte address 0x4 - core index']
  #allocation1 [shape = 'u32[72,128]{1,0:T(1,128)}', space=vmem, size = 0x9000, scoped, tag = 'internal scratch']
  %s0 = inlined_call_operand.vmem [shape: bf16[18,512], index: 0, kind: input, shape index: {}]
  %s1 = inlined_call_operand.vmem [shape: bf16[512,64], index: 1, kind: input, shape index: {}]
  %s2 = inlined_call_operand.vmem [shape: f32[1,64], index: 2, kind: input, shape index: {}]
  %s3 = inlined_call_operand.vmem [shape: bf16[18,64], index: 3, kind: output, shape index: {}]
  %s4 = sld [smem:[#allocation0]]
  $region22: #{dqn_forward.5} parent=0
    _
  %s6 = ssub.s32 1, %s4
  %s7 = scalar_select 0, %s6, %s4
  // Predicated region
  $region2: #{dqn_forward.5} parent=0 // pred_check
    _
  $region3: #{dqn_forward.5} parent=0 // pred_check_branch
    %9 = sbr.rel (0) target = $region5
  $region4: #{dqn_forward.5} parent=0 // pred_region
    _
  $region5: #{dqn_forward.5} parent=0 // pred_fallthru
    _
  // Predicated region
  $region6: #{dqn_forward.5} parent=0 // pred_check
    _
  $region7: #{dqn_forward.5} parent=0 // pred_check_branch
    %11 = sbr.rel (0) target = $region9
  $region8: #{dqn_forward.5} parent=0 // pred_region
    _
  $region9: #{dqn_forward.5} parent=0 // pred_fallthru
    _
  // Predicated region
  $region10: #{dqn_forward.5} parent=0 // pred_check
    _
  $region11: #{dqn_forward.5} parent=0 // pred_check_branch
    %13 = sbr.rel (0) target = $region13
  $region12: #{dqn_forward.5} parent=0 // pred_region
    _
  $region13: #{dqn_forward.5} parent=0 // pred_fallthru
    _
  %v14 = vld [vmem:[%s0] sm:$0xff]
  %v15 = vld [vmem:[%s0 + $0x8] sm:$0xff]
  %v16 = vld [vmem:[%s0 + $0x10] sm:$0xff]
  %v17 = vld [vmem:[%s0 + $0x18] sm:$0xff]
  %v18 = vld [vmem:[%s0 + $0x20] sm:$0x11]
  %v19 = vld [vmem:[%s0 + $0x28] sm:$0x11]
  %v20 = vld [vmem:[%s1] sm:$0xf]
  %v21 = vld [vmem:[%s1 + $0x4] sm:$0xf]
  %v22 = vld [vmem:[%s1 + $0x8] sm:$0xf]
  %v23 = vld [vmem:[%s1 + $0xc] sm:$0xf]
  %v24 = vld [vmem:[%s1 + $0x10] sm:$0xf]
  %v25 = vld [vmem:[%s1 + $0x14] sm:$0xf]
  %v26 = vld [vmem:[%s1 + $0x18] sm:$0xf]
  %v27 = vld [vmem:[%s1 + $0x1c] sm:$0xf]
  %v28 = vld [vmem:[%s1 + $0x20] sm:$0xf]
  %v29 = vld [vmem:[%s1 + $0x24] sm:$0xf]
  %v30 = vld [vmem:[%s1 + $0x28] sm:$0xf]
  %v31 = vld [vmem:[%s1 + $0x2c] sm:$0xf]
  %v32 = vld [vmem:[%s1 + $0x30] sm:$0xf]
  %v33 = vld [vmem:[%s1 + $0x34] sm:$0xf]
  %v34 = vld [vmem:[%s1 + $0x38] sm:$0xf]
  %v35 = vld [vmem:[%s1 + $0x3c] sm:$0xf]
  %v36 = vld [vmem:[%s1 + $0x40] sm:$0xf]
  %v37 = vld [vmem:[%s1 + $0x44] sm:$0xf]
  %v38 = vld [vmem:[%s1 + $0x48] sm:$0xf]
  %v39 = vld [vmem:[%s1 + $0x4c] sm:$0xf]
  %v40 = vld [vmem:[%s1 + $0x50] sm:$0xf]
  %v41 = vld [vmem:[%s1 + $0x54] sm:$0xf]
  %v42 = vld [vmem:[%s1 + $0x58] sm:$0xf]
  %v43 = vld [vmem:[%s1 + $0x5c] sm:$0xf]
  %v44 = vld [vmem:[%s1 + $0x60] sm:$0xf]
  %v45 = vld [vmem:[%s1 + $0x64] sm:$0xf]
  %v46 = vld [vmem:[%s1 + $0x68] sm:$0xf]
  %v47 = vld [vmem:[%s1 + $0x6c] sm:$0xf]
  %v48 = vld [vmem:[%s1 + $0x70] sm:$0xf]
  %v49 = vld [vmem:[%s1 + $0x74] sm:$0xf]
  %v50 = vld [vmem:[%s1 + $0x78] sm:$0xf]
  %v51 = vld [vmem:[%s1 + $0x7c] sm:$0xf]
  %v52 = vld [vmem:[%s1 + $0x80] sm:$0xf]
  %v53 = vld [vmem:[%s1 + $0x84] sm:$0xf]
  %v54 = vld [vmem:[%s1 + $0x88] sm:$0xf]
  %v55 = vld [vmem:[%s1 + $0x8c] sm:$0xf]
  %v56 = vld [vmem:[%s1 + $0x90] sm:$0xf]
  %v57 = vld [vmem:[%s1 + $0x94] sm:$0xf]
  %v58 = vld [vmem:[%s1 + $0x98] sm:$0xf]
  %v59 = vld [vmem:[%s1 + $0x9c] sm:$0xf]
  %v60 = vld [vmem:[%s1 + $0xa0] sm:$0xf]
  %v61 = vld [vmem:[%s1 + $0xa4] sm:$0xf]
  %v62 = vld [vmem:[%s1 + $0xa8] sm:$0xf]
  %v63 = vld [vmem:[%s1 + $0xac] sm:$0xf]
  %v64 = vld [vmem:[%s1 + $0xb0] sm:$0xf]
  %v65 = vld [vmem:[%s1 + $0xb4] sm:$0xf]
  %v66 = vld [vmem:[%s1 + $0xb8] sm:$0xf]
  %v67 = vld [vmem:[%s1 + $0xbc] sm:$0xf]
  %v68 = vld [vmem:[%s1 + $0xc0] sm:$0xf]
  %v69 = vld [vmem:[%s1 + $0xc4] sm:$0xf]
  %v70 = vld [vmem:[%s1 + $0xc8] sm:$0xf]
  %v71 = vld [vmem:[%s1 + $0xcc] sm:$0xf]
  %v72 = vld [vmem:[%s1 + $0xd0] sm:$0xf]
  %v73 = vld [vmem:[%s1 + $0xd4] sm:$0xf]
  %v74 = vld [vmem:[%s1 + $0xd8] sm:$0xf]
  %v75 = vld [vmem:[%s1 + $0xdc] sm:$0xf]
  %v76 = vld [vmem:[%s1 + $0xe0] sm:$0xf]
  %v77 = vld [vmem:[%s1 + $0xe4] sm:$0xf]
  %v78 = vld [vmem:[%s1 + $0xe8] sm:$0xf]
  %v79 = vld [vmem:[%s1 + $0xec] sm:$0xf]
  %v80 = vld [vmem:[%s1 + $0xf0] sm:$0xf]
  %v81 = vld [vmem:[%s1 + $0xf4] sm:$0xf]
  %v82 = vld [vmem:[%s1 + $0xf8] sm:$0xf]
  %v83 = vld [vmem:[%s1 + $0xfc] sm:$0xf]
  %v84 = vld [vmem:[%s2] sm:$0x1]
  %v86 = vperm.slane %v84, 0
  %v94 = vunpack.c.l.b16 %v14
  %v95 = vunpack.c.h.b16 %v14
  %v96 = vunpack.c.l.b16 %v15
  %v97 = vunpack.c.h.b16 %v15
  %v98 = vunpack.c.l.b16 %v16
  %v99 = vunpack.c.h.b16 %v16
  %v100 = vunpack.c.l.b16 %v17
  %v101 = vunpack.c.h.b16 %v17
  %v102 = vunpack.c.l.b16 %v18
  %v103 = vunpack.c.h.b16 %v18
  %v104 = vunpack.c.l.b16 %v19
  %v105 = vunpack.c.h.b16 %v19
  %v106 = vpack.c.b16 %v98, %v94
  %v107 = vpack.c.b16 %v99, %v95
  %v108 = vpack.c.b16 %v100, %v96
  %v109 = vpack.c.b16 %v101, %v97
  %v110 = vpack.c.b16 %v102, %v102
  %v111 = vpack.c.b16 %v103, %v103
  %v112 = vpack.c.b16 %v104, %v104
  %v113 = vpack.c.b16 %v105, %v105
  %v186 = vunpack.c.l.b16 %v20
  %v187 = vunpack.c.l.b16 %v21
  %v188 = vunpack.c.l.b16 %v22
  %v189 = vunpack.c.l.b16 %v23
  %v190 = vunpack.c.l.b16 %v24
  %v191 = vunpack.c.l.b16 %v25
  %v192 = vunpack.c.l.b16 %v26
  %v193 = vunpack.c.l.b16 %v27
  %v194 = vunpack.c.l.b16 %v28
  %v195 = vunpack.c.l.b16 %v29
  %v196 = vunpack.c.l.b16 %v30
  %v197 = vunpack.c.l.b16 %v31
  %v198 = vunpack.c.l.b16 %v32
  %v199 = vunpack.c.l.b16 %v33
  %v200 = vunpack.c.l.b16 %v34
  %v201 = vunpack.c.l.b16 %v35
  %v202 = vunpack.c.l.b16 %v36
  %v203 = vunpack.c.l.b16 %v37
  %v204 = vunpack.c.l.b16 %v38
  %v205 = vunpack.c.l.b16 %v39
  %v206 = vunpack.c.l.b16 %v40
  %v207 = vunpack.c.l.b16 %v41
  %v208 = vunpack.c.l.b16 %v42
  %v209 = vunpack.c.l.b16 %v43
  %v210 = vunpack.c.l.b16 %v44
  %v211 = vunpack.c.l.b16 %v45
  %v212 = vunpack.c.l.b16 %v46
  %v213 = vunpack.c.l.b16 %v47
  %v214 = vunpack.c.l.b16 %v48
  %v215 = vunpack.c.l.b16 %v49
  %v216 = vunpack.c.l.b16 %v50
  %v217 = vunpack.c.l.b16 %v51
  %v218 = vunpack.c.l.b16 %v52
  %v219 = vunpack.c.l.b16 %v53
  %v220 = vunpack.c.l.b16 %v54
  %v221 = vunpack.c.l.b16 %v55
  %v222 = vunpack.c.l.b16 %v56
  %v223 = vunpack.c.l.b16 %v57
  %v224 = vunpack.c.l.b16 %v58
  %v225 = vunpack.c.l.b16 %v59
  %v226 = vunpack.c.l.b16 %v60
  %v227 = vunpack.c.l.b16 %v61
  %v228 = vunpack.c.l.b16 %v62
  %v229 = vunpack.c.l.b16 %v63
  %v230 = vunpack.c.l.b16 %v64
  %v231 = vunpack.c.l.b16 %v65
  %v232 = vunpack.c.l.b16 %v66
  %v233 = vunpack.c.l.b16 %v67
  %v234 = vunpack.c.l.b16 %v68
  %v235 = vunpack.c.l.b16 %v69
  %v236 = vunpack.c.l.b16 %v70
  %v237 = vunpack.c.l.b16 %v71
  %v238 = vunpack.c.l.b16 %v72
  %v239 = vunpack.c.l.b16 %v73
  %v240 = vunpack.c.l.b16 %v74
  %v241 = vunpack.c.l.b16 %v75
  %v242 = vunpack.c.l.b16 %v76
  %v243 = vunpack.c.l.b16 %v77
  %v244 = vunpack.c.l.b16 %v78
  %v245 = vunpack.c.l.b16 %v79
  %v246 = vunpack.c.l.b16 %v80
  %v247 = vunpack.c.l.b16 %v81
  %v248 = vunpack.c.l.b16 %v82
  %v249 = vunpack.c.l.b16 %v83
  %v250 = vpack.c.b16 %v187, %v186
  %v251 = vpack.c.b16 %v189, %v188
  %v252 = vpack.c.b16 %v191, %v190
  %v253 = vpack.c.b16 %v193, %v192
  %v254 = vpack.c.b16 %v195, %v194
  %v255 = vpack.c.b16 %v197, %v196
  %v256 = vpack.c.b16 %v199, %v198
  %v257 = vpack.c.b16 %v201, %v200
  %v258 = vpack.c.b16 %v203, %v202
  %v259 = vpack.c.b16 %v205, %v204
  %v260 = vpack.c.b16 %v207, %v206
  %v261 = vpack.c.b16 %v209, %v208
  %v262 = vpack.c.b16 %v211, %v210
  %v263 = vpack.c.b16 %v213, %v212
  %v264 = vpack.c.b16 %v215, %v214
  %v265 = vpack.c.b16 %v217, %v216
  %v266 = vpack.c.b16 %v219, %v218
  %v267 = vpack.c.b16 %v221, %v220
  %v268 = vpack.c.b16 %v223, %v222
  %v269 = vpack.c.b16 %v225, %v224
  %v270 = vpack.c.b16 %v227, %v226
  %v271 = vpack.c.b16 %v229, %v228
  %v272 = vpack.c.b16 %v231, %v230
  %v273 = vpack.c.b16 %v233, %v232
  %v274 = vpack.c.b16 %v235, %v234
  %v275 = vpack.c.b16 %v237, %v236
  %v276 = vpack.c.b16 %v239, %v238
  %v277 = vpack.c.b16 %v241, %v240
  %v278 = vpack.c.b16 %v243, %v242
  %v279 = vpack.c.b16 %v245, %v244
  %v280 = vpack.c.b16 %v247, %v246
  %v281 = vpack.c.b16 %v249, %v248
  %314 = vmatpush.bf16.msra.mxu0 %v257
  %315 = vmatpush.bf16.msra.mxu0 %v256
  %316 = vmatpush.bf16.msra.mxu0 %v255
  %317 = vmatpush.bf16.msra.mxu0 %v254
  %318 = vmatpush.bf16.msra.mxu0 %v253
  %319 = vmatpush.bf16.msra.mxu0 %v252
  %320 = vmatpush.bf16.msra.mxu0 %v251
  %321 = vmatpush.bf16.msra.mxu0 %v250
  %322 = vmatmul.bf16.gmra.mxu0 %v106
  %v323 = vpop.f32.mrf.mxu0
  %v324 = vadd.f32 %v86, %v323
  %v325 = vpop.f32.mrf.mxu0
  %v326 = vadd.f32 %v86, %v325
  %327 = vmatmul.bf16.gmra.mxu0 %v110
  %v328 = vpop.f32.mrf.mxu0
  %v329 = vadd.f32 %v86, %v328
  %v330 = vpop.f32.mrf.mxu0
  %331 = vdwg.mxu0
  %332 = vmatpush.bf16.msra.mxu0 %v265
  %333 = vmatpush.bf16.msra.mxu0 %v264
  %334 = vmatpush.bf16.msra.mxu0 %v263
  %335 = vmatpush.bf16.msra.mxu0 %v262
  %336 = vmatpush.bf16.msra.mxu0 %v261
  %337 = vmatpush.bf16.msra.mxu0 %v260
  %338 = vmatpush.bf16.msra.mxu0 %v259
  %339 = vmatpush.bf16.msra.mxu0 %v258
  %340 = vmatmul.bf16.gmra.mxu0 %v107
  %v341 = vpop.f32.mrf.mxu0
  %v342 = vadd.f32 %v324, %v341
  %v343 = vpop.f32.mrf.mxu0
  %v344 = vadd.f32 %v326, %v343
  %345 = vmatmul.bf16.gmra.mxu0 %v111
  %v346 = vpop.f32.mrf.mxu0
  %v347 = vadd.f32 %v329, %v346
  %v348 = vpop.f32.mrf.mxu0
  %349 = vdwg.mxu0
  %350 = vmatpush.bf16.msra.mxu0 %v273
  %351 = vmatpush.bf16.msra.mxu0 %v272
  %352 = vmatpush.bf16.msra.mxu0 %v271
  %353 = vmatpush.bf16.msra.mxu0 %v270
  %354 = vmatpush.bf16.msra.mxu0 %v269
  %355 = vmatpush.bf16.msra.mxu0 %v268
  %356 = vmatpush.bf16.msra.mxu0 %v267
  %357 = vmatpush.bf16.msra.mxu0 %v266
  %358 = vmatmul.bf16.gmra.mxu0 %v108
  %v359 = vpop.f32.mrf.mxu0
  %v360 = vadd.f32 %v342, %v359
  %v361 = vpop.f32.mrf.mxu0
  %v362 = vadd.f32 %v344, %v361
  %363 = vmatmul.bf16.gmra.mxu0 %v112
  %v364 = vpop.f32.mrf.mxu0
  %v365 = vadd.f32 %v347, %v364
  %v366 = vpop.f32.mrf.mxu0
  %367 = vdwg.mxu0
  %368 = vmatpush.bf16.msra.mxu0 %v281
  %369 = vmatpush.bf16.msra.mxu0 %v280
  %370 = vmatpush.bf16.msra.mxu0 %v279
  %371 = vmatpush.bf16.msra.mxu0 %v278
  %372 = vmatpush.bf16.msra.mxu0 %v277
  %373 = vmatpush.bf16.msra.mxu0 %v276
  %374 = vmatpush.bf16.msra.mxu0 %v275
  %375 = vmatpush.bf16.msra.mxu0 %v274
  %376 = vmatmul.bf16.gmra.mxu0 %v109
  %v377 = vpop.f32.mrf.mxu0
  %v378 = vadd.f32 %v360, %v377
  %v379 = vpop.f32.mrf.mxu0
  %v380 = vadd.f32 %v362, %v379
  %381 = vmatmul.bf16.gmra.mxu0 %v113
  %v382 = vpop.f32.mrf.mxu0
  %v383 = vadd.f32 %v365, %v382
  %v384 = vpop.f32.mrf.mxu0
  %385 = vdwg.mxu0
  %v386 = vmax.f32 %v378, 0.0
  %v387 = vmax.f32 %v380, 0.0
  %v388 = vmax.f32 %v383, 0.0
  %v389 = vpack.c.bf16 %v386, %v386
  %v390 = vpack.c.bf16 %v387, %v387
  %v391 = vpack.c.bf16 %v388, %v388
  %vm392 = vcmask 519168
  %393 = vst.msk [vmem:[%s3] sm:$0xf] %vm392, %v389
  %394 = vst.msk [vmem:[%s3 + $0x4] sm:$0xf] %vm392, %v390
  %vm395 = vcmask 516096
  %396 = vst.msk [vmem:[%s3 + $0x8] sm:$0x1] %vm395, %v391
  // Predicated region
  $region14: #{dqn_forward.5} parent=0 // pred_check
    _
  $region15: #{dqn_forward.5} parent=0 // pred_check_branch
    %398 = sbr.rel (0) target = $region17
  $region16: #{dqn_forward.5} parent=0 // pred_region
    _
  $region17: #{dqn_forward.5} parent=0 // pred_fallthru
    _
  // Predicated region
  $region18: #{dqn_forward.5} parent=0 // pred_check
    _
  $region19: #{dqn_forward.5} parent=0 // pred_check_branch
    %400 = sbr.rel (0) target = $region21
  $region20: #{dqn_forward.5} parent=0 // pred_region
    _
  $region21: #{dqn_forward.5} parent=0 // pred_fallthru
    _

// kernel: dqn_forward.6
$region0: #{dqn_forward.6}
  #allocation0 [shape = 'u32[]', space=smem, size = 0x4, offset = 0x4, fixed_abs, tag = 'smem constant byte address 0x4 - core index']
  #allocation1 [shape = 'u32[72,128]{1,0:T(1,128)}', space=vmem, size = 0x9000, scoped, tag = 'internal scratch']
  %s0 = inlined_call_operand.vmem [shape: bf16[2,576], index: 0, kind: input, shape index: {}]
  %s1 = inlined_call_operand.vmem [shape: bf16[576,64], index: 1, kind: input, shape index: {}]
  %s2 = inlined_call_operand.vmem [shape: f32[1,64], index: 2, kind: input, shape index: {}]
  %s3 = inlined_call_operand.vmem [shape: bf16[2,64], index: 3, kind: output, shape index: {}]
  %s4 = sld [smem:[#allocation0]]
  $region22: #{dqn_forward.6} parent=0
    _
  %s6 = ssub.s32 1, %s4
  %s7 = scalar_select 0, %s6, %s4
  // Predicated region
  $region2: #{dqn_forward.6} parent=0 // pred_check
    _
  $region3: #{dqn_forward.6} parent=0 // pred_check_branch
    %9 = sbr.rel (0) target = $region5
  $region4: #{dqn_forward.6} parent=0 // pred_region
    _
  $region5: #{dqn_forward.6} parent=0 // pred_fallthru
    _
  // Predicated region
  $region6: #{dqn_forward.6} parent=0 // pred_check
    _
  $region7: #{dqn_forward.6} parent=0 // pred_check_branch
    %11 = sbr.rel (0) target = $region9
  $region8: #{dqn_forward.6} parent=0 // pred_region
    _
  $region9: #{dqn_forward.6} parent=0 // pred_fallthru
    _
  // Predicated region
  $region10: #{dqn_forward.6} parent=0 // pred_check
    _
  $region11: #{dqn_forward.6} parent=0 // pred_check_branch
    %13 = sbr.rel (0) target = $region13
  $region12: #{dqn_forward.6} parent=0 // pred_region
    _
  $region13: #{dqn_forward.6} parent=0 // pred_fallthru
    _
  %v15 = vld [vmem:[%s0] sm:$0x1f]
  %v16 = vld [vmem:[%s1] sm:$0xf]
  %v17 = vld [vmem:[%s1 + $0x4] sm:$0xf]
  %v18 = vld [vmem:[%s1 + $0x8] sm:$0xf]
  %v19 = vld [vmem:[%s1 + $0xc] sm:$0xf]
  %v20 = vld [vmem:[%s1 + $0x10] sm:$0xf]
  %v21 = vld [vmem:[%s1 + $0x14] sm:$0xf]
  %v22 = vld [vmem:[%s1 + $0x18] sm:$0xf]
  %v23 = vld [vmem:[%s1 + $0x1c] sm:$0xf]
  %v24 = vld [vmem:[%s1 + $0x20] sm:$0xf]
  %v25 = vld [vmem:[%s1 + $0x24] sm:$0xf]
  %v26 = vld [vmem:[%s1 + $0x28] sm:$0xf]
  %v27 = vld [vmem:[%s1 + $0x2c] sm:$0xf]
  %v28 = vld [vmem:[%s1 + $0x30] sm:$0xf]
  %v29 = vld [vmem:[%s1 + $0x34] sm:$0xf]
  %v30 = vld [vmem:[%s1 + $0x38] sm:$0xf]
  %v31 = vld [vmem:[%s1 + $0x3c] sm:$0xf]
  %v32 = vld [vmem:[%s1 + $0x40] sm:$0xf]
  %v33 = vld [vmem:[%s1 + $0x44] sm:$0xf]
  %v34 = vld [vmem:[%s1 + $0x48] sm:$0xf]
  %v35 = vld [vmem:[%s1 + $0x4c] sm:$0xf]
  %v36 = vld [vmem:[%s1 + $0x50] sm:$0xf]
  %v37 = vld [vmem:[%s1 + $0x54] sm:$0xf]
  %v38 = vld [vmem:[%s1 + $0x58] sm:$0xf]
  %v39 = vld [vmem:[%s1 + $0x5c] sm:$0xf]
  %v40 = vld [vmem:[%s1 + $0x60] sm:$0xf]
  %v41 = vld [vmem:[%s1 + $0x64] sm:$0xf]
  %v42 = vld [vmem:[%s1 + $0x68] sm:$0xf]
  %v43 = vld [vmem:[%s1 + $0x6c] sm:$0xf]
  %v44 = vld [vmem:[%s1 + $0x70] sm:$0xf]
  %v45 = vld [vmem:[%s1 + $0x74] sm:$0xf]
  %v46 = vld [vmem:[%s1 + $0x78] sm:$0xf]
  %v47 = vld [vmem:[%s1 + $0x7c] sm:$0xf]
  %v48 = vld [vmem:[%s1 + $0x80] sm:$0xf]
  %v49 = vld [vmem:[%s1 + $0x84] sm:$0xf]
  %v50 = vld [vmem:[%s1 + $0x88] sm:$0xf]
  %v51 = vld [vmem:[%s1 + $0x8c] sm:$0xf]
  %v52 = vld [vmem:[%s1 + $0x90] sm:$0xf]
  %v53 = vld [vmem:[%s1 + $0x94] sm:$0xf]
  %v54 = vld [vmem:[%s1 + $0x98] sm:$0xf]
  %v55 = vld [vmem:[%s1 + $0x9c] sm:$0xf]
  %v56 = vld [vmem:[%s1 + $0xa0] sm:$0xf]
  %v57 = vld [vmem:[%s1 + $0xa4] sm:$0xf]
  %v58 = vld [vmem:[%s1 + $0xa8] sm:$0xf]
  %v59 = vld [vmem:[%s1 + $0xac] sm:$0xf]
  %v60 = vld [vmem:[%s1 + $0xb0] sm:$0xf]
  %v61 = vld [vmem:[%s1 + $0xb4] sm:$0xf]
  %v62 = vld [vmem:[%s1 + $0xb8] sm:$0xf]
  %v63 = vld [vmem:[%s1 + $0xbc] sm:$0xf]
  %v64 = vld [vmem:[%s1 + $0xc0] sm:$0xf]
  %v65 = vld [vmem:[%s1 + $0xc4] sm:$0xf]
  %v66 = vld [vmem:[%s1 + $0xc8] sm:$0xf]
  %v67 = vld [vmem:[%s1 + $0xcc] sm:$0xf]
  %v68 = vld [vmem:[%s1 + $0xd0] sm:$0xf]
  %v69 = vld [vmem:[%s1 + $0xd4] sm:$0xf]
  %v70 = vld [vmem:[%s1 + $0xd8] sm:$0xf]
  %v71 = vld [vmem:[%s1 + $0xdc] sm:$0xf]
  %v72 = vld [vmem:[%s1 + $0xe0] sm:$0xf]
  %v73 = vld [vmem:[%s1 + $0xe4] sm:$0xf]
  %v74 = vld [vmem:[%s1 + $0xe8] sm:$0xf]
  %v75 = vld [vmem:[%s1 + $0xec] sm:$0xf]
  %v76 = vld [vmem:[%s1 + $0xf0] sm:$0xf]
  %v77 = vld [vmem:[%s1 + $0xf4] sm:$0xf]
  %v78 = vld [vmem:[%s1 + $0xf8] sm:$0xf]
  %v79 = vld [vmem:[%s1 + $0xfc] sm:$0xf]
  %v80 = vld [vmem:[%s1 + $0x100] sm:$0xf]
  %v81 = vld [vmem:[%s1 + $0x104] sm:$0xf]
  %v82 = vld [vmem:[%s1 + $0x108] sm:$0xf]
  %v83 = vld [vmem:[%s1 + $0x10c] sm:$0xf]
  %v84 = vld [vmem:[%s1 + $0x110] sm:$0xf]
  %v85 = vld [vmem:[%s1 + $0x114] sm:$0xf]
  %v86 = vld [vmem:[%s1 + $0x118] sm:$0xf]
  %v87 = vld [vmem:[%s1 + $0x11c] sm:$0xf]
  %v88 = vld [vmem:[%s2] sm:$0x1]
  %v90 = vperm.slane %v88, 0
  %93 = vst [vmem:[#allocation1] ss:$9 sm:$0xff] %v15
  %v94 = vld [vmem:[#allocation1] sm:$0xff]
  %v95 = vld [vmem:[#allocation1 + $0x9] sm:$0xff]
  %v96 = vld [vmem:[#allocation1 + $0x12] sm:$0xff]
  %v97 = vld [vmem:[#allocation1 + $0x1b] sm:$0xff]
  %v98 = vld [vmem:[#allocation1 + $0x24] sm:$0xff]
  %v175 = vunpack.c.l.b16 %v16
  %v176 = vunpack.c.l.b16 %v17
  %v177 = vunpack.c.l.b16 %v18
  %v178 = vunpack.c.l.b16 %v19
  %v179 = vunpack.c.l.b16 %v20
  %v180 = vunpack.c.l.b16 %v21
  %v181 = vunpack.c.l.b16 %v22
  %v182 = vunpack.c.l.b16 %v23
  %v183 = vunpack.c.l.b16 %v24
  %v184 = vunpack.c.l.b16 %v25
  %v185 = vunpack.c.l.b16 %v26
  %v186 = vunpack.c.l.b16 %v27
  %v187 = vunpack.c.l.b16 %v28
  %v188 = vunpack.c.l.b16 %v29
  %v189 = vunpack.c.l.b16 %v30
  %v190 = vunpack.c.l.b16 %v31
  %v191 = vunpack.c.l.b16 %v32
  %v192 = vunpack.c.l.b16 %v33
  %v193 = vunpack.c.l.b16 %v34
  %v194 = vunpack.c.l.b16 %v35
  %v195 = vunpack.c.l.b16 %v36
  %v196 = vunpack.c.l.b16 %v37
  %v197 = vunpack.c.l.b16 %v38
  %v198 = vunpack.c.l.b16 %v39
  %v199 = vunpack.c.l.b16 %v40
  %v200 = vunpack.c.l.b16 %v41
  %v201 = vunpack.c.l.b16 %v42
  %v202 = vunpack.c.l.b16 %v43
  %v203 = vunpack.c.l.b16 %v44
  %v204 = vunpack.c.l.b16 %v45
  %v205 = vunpack.c.l.b16 %v46
  %v206 = vunpack.c.l.b16 %v47
  %v207 = vunpack.c.l.b16 %v48
  %v208 = vunpack.c.l.b16 %v49
  %v209 = vunpack.c.l.b16 %v50
  %v210 = vunpack.c.l.b16 %v51
  %v211 = vunpack.c.l.b16 %v52
  %v212 = vunpack.c.l.b16 %v53
  %v213 = vunpack.c.l.b16 %v54
  %v214 = vunpack.c.l.b16 %v55
  %v215 = vunpack.c.l.b16 %v56
  %v216 = vunpack.c.l.b16 %v57
  %v217 = vunpack.c.l.b16 %v58
  %v218 = vunpack.c.l.b16 %v59
  %v219 = vunpack.c.l.b16 %v60
  %v220 = vunpack.c.l.b16 %v61
  %v221 = vunpack.c.l.b16 %v62
  %v222 = vunpack.c.l.b16 %v63
  %v223 = vunpack.c.l.b16 %v64
  %v224 = vunpack.c.l.b16 %v65
  %v225 = vunpack.c.l.b16 %v66
  %v226 = vunpack.c.l.b16 %v67
  %v227 = vunpack.c.l.b16 %v68
  %v228 = vunpack.c.l.b16 %v69
  %v229 = vunpack.c.l.b16 %v70
  %v230 = vunpack.c.l.b16 %v71
  %v231 = vunpack.c.l.b16 %v72
  %v232 = vunpack.c.l.b16 %v73
  %v233 = vunpack.c.l.b16 %v74
  %v234 = vunpack.c.l.b16 %v75
  %v235 = vunpack.c.l.b16 %v76
  %v236 = vunpack.c.l.b16 %v77
  %v237 = vunpack.c.l.b16 %v78
  %v238 = vunpack.c.l.b16 %v79
  %v239 = vunpack.c.l.b16 %v80
  %v240 = vunpack.c.l.b16 %v81
  %v241 = vunpack.c.l.b16 %v82
  %v242 = vunpack.c.l.b16 %v83
  %v243 = vunpack.c.l.b16 %v84
  %v244 = vunpack.c.l.b16 %v85
  %v245 = vunpack.c.l.b16 %v86
  %v246 = vunpack.c.l.b16 %v87
  %v247 = vpack.c.b16 %v176, %v175
  %v248 = vpack.c.b16 %v178, %v177
  %v249 = vpack.c.b16 %v180, %v179
  %v250 = vpack.c.b16 %v182, %v181
  %v251 = vpack.c.b16 %v184, %v183
  %v252 = vpack.c.b16 %v186, %v185
  %v253 = vpack.c.b16 %v188, %v187
  %v254 = vpack.c.b16 %v190, %v189
  %v255 = vpack.c.b16 %v192, %v191
  %v256 = vpack.c.b16 %v194, %v193
  %v257 = vpack.c.b16 %v196, %v195
  %v258 = vpack.c.b16 %v198, %v197
  %v259 = vpack.c.b16 %v200, %v199
  %v260 = vpack.c.b16 %v202, %v201
  %v261 = vpack.c.b16 %v204, %v203
  %v262 = vpack.c.b16 %v206, %v205
  %v263 = vpack.c.b16 %v208, %v207
  %v264 = vpack.c.b16 %v210, %v209
  %v265 = vpack.c.b16 %v212, %v211
  %v266 = vpack.c.b16 %v214, %v213
  %v267 = vpack.c.b16 %v216, %v215
  %v268 = vpack.c.b16 %v218, %v217
  %v269 = vpack.c.b16 %v220, %v219
  %v270 = vpack.c.b16 %v222, %v221
  %v271 = vpack.c.b16 %v224, %v223
  %v272 = vpack.c.b16 %v226, %v225
  %v273 = vpack.c.b16 %v228, %v227
  %v274 = vpack.c.b16 %v230, %v229
  %v275 = vpack.c.b16 %v232, %v231
  %v276 = vpack.c.b16 %v234, %v233
  %v277 = vpack.c.b16 %v236, %v235
  %v278 = vpack.c.b16 %v238, %v237
  %v279 = vpack.c.b16 %v240, %v239
  %v280 = vpack.c.b16 %v242, %v241
  %v281 = vpack.c.b16 %v244, %v243
  %v282 = vpack.c.b16 %v246, %v245
  %vm319 = vcmask 523264
  %v320 = vsel %vm319, %v98, 0
  %322 = vmatpush.bf16.msra.mxu0 %v254
  %323 = vmatpush.bf16.msra.mxu0 %v253
  %324 = vmatpush.bf16.msra.mxu0 %v252
  %325 = vmatpush.bf16.msra.mxu0 %v251
  %326 = vmatpush.bf16.msra.mxu0 %v250
  %327 = vmatpush.bf16.msra.mxu0 %v249
  %328 = vmatpush.bf16.msra.mxu0 %v248
  %329 = vmatpush.bf16.msra.mxu0 %v247
  %330 = vmatmul.bf16.gmra.mxu0 %v94
  %v331 = vpop.f32.mrf.mxu0
  %v332 = vadd.f32 %v90, %v331
  %v333 = vpop.f32.mrf.mxu0
  %334 = vdwg.mxu0
  %335 = vmatpush.bf16.msra.mxu0 %v262
  %336 = vmatpush.bf16.msra.mxu0 %v261
  %337 = vmatpush.bf16.msra.mxu0 %v260
  %338 = vmatpush.bf16.msra.mxu0 %v259
  %339 = vmatpush.bf16.msra.mxu0 %v258
  %340 = vmatpush.bf16.msra.mxu0 %v257
  %341 = vmatpush.bf16.msra.mxu0 %v256
  %342 = vmatpush.bf16.msra.mxu0 %v255
  %343 = vmatmul.bf16.gmra.mxu0 %v95
  %v344 = vpop.f32.mrf.mxu0
  %v345 = vadd.f32 %v332, %v344
  %v346 = vpop.f32.mrf.mxu0
  %347 = vdwg.mxu0
  %348 = vmatpush.bf16.msra.mxu0 %v270
  %349 = vmatpush.bf16.msra.mxu0 %v269
  %350 = vmatpush.bf16.msra.mxu0 %v268
  %351 = vmatpush.bf16.msra.mxu0 %v267
  %352 = vmatpush.bf16.msra.mxu0 %v266
  %353 = vmatpush.bf16.msra.mxu0 %v265
  %354 = vmatpush.bf16.msra.mxu0 %v264
  %355 = vmatpush.bf16.msra.mxu0 %v263
  %356 = vmatmul.bf16.gmra.mxu0 %v96
  %v357 = vpop.f32.mrf.mxu0
  %v358 = vadd.f32 %v345, %v357
  %v359 = vpop.f32.mrf.mxu0
  %360 = vdwg.mxu0
  %361 = vmatpush.bf16.msra.mxu0 %v278
  %362 = vmatpush.bf16.msra.mxu0 %v277
  %363 = vmatpush.bf16.msra.mxu0 %v276
  %364 = vmatpush.bf16.msra.mxu0 %v275
  %365 = vmatpush.bf16.msra.mxu0 %v274
  %366 = vmatpush.bf16.msra.mxu0 %v273
  %367 = vmatpush.bf16.msra.mxu0 %v272
  %368 = vmatpush.bf16.msra.mxu0 %v271
  %369 = vmatmul.bf16.gmra.mxu0 %v97
  %v370 = vpop.f32.mrf.mxu0
  %v371 = vadd.f32 %v358, %v370
  %v372 = vpop.f32.mrf.mxu0
  %373 = vdwg.mxu0
  %374 = vmatpush.bf16.msra.mxu0 0
  %375 = vmatpush.bf16.msra.mxu0 0
  %376 = vmatpush.bf16.msra.mxu0 0
  %377 = vmatpush.bf16.msra.mxu0 0
  %378 = vmatpush.bf16.msra.mxu0 %v282
  %379 = vmatpush.bf16.msra.mxu0 %v281
  %380 = vmatpush.bf16.msra.mxu0 %v280
  %381 = vmatpush.bf16.msra.mxu0 %v279
  %382 = vmatmul.bf16.gmra.mxu0 %v320
  %v383 = vpop.f32.mrf.mxu0
  %v384 = vadd.f32 %v371, %v383
  %v385 = vpop.f32.mrf.mxu0
  %386 = vdwg.mxu0
  %v387 = vmax.f32 %v384, 0.0
  %v388 = vpack.c.bf16 %v387, %v387
  %vm389 = vcmask 516096
  %390 = vst.msk [vmem:[%s3] sm:$0x1] %vm389, %v388
  // Predicated region
  $region14: #{dqn_forward.6} parent=0 // pred_check
    _
  $region15: #{dqn_forward.6} parent=0 // pred_check_branch
    %392 = sbr.rel (0) target = $region17
  $region16: #{dqn_forward.6} parent=0 // pred_region
    _
  $region17: #{dqn_forward.6} parent=0 // pred_fallthru
    _
  // Predicated region
  $region18: #{dqn_forward.6} parent=0 // pred_check
    _
  $region19: #{dqn_forward.6} parent=0 // pred_check_branch
    %394 = sbr.rel (0) target = $region21
  $region20: #{dqn_forward.6} parent=0 // pred_region
    _
  $region21: #{dqn_forward.6} parent=0 // pred_fallthru
    _

// kernel: dqn_forward.7
$region0: #{dqn_forward.7}
  #allocation0 [shape = 'u32[]', space=smem, size = 0x4, offset = 0x4, fixed_abs, tag = 'smem constant byte address 0x4 - core index']
  #allocation1 [shape = 'u32[72,128]{1,0:T(1,128)}', space=vmem, size = 0x9000, scoped, tag = 'internal scratch']
  %s0 = inlined_call_operand.vmem [shape: bf16[2,64], index: 0, kind: input, shape index: {}]
  %s1 = inlined_call_operand.vmem [shape: bf16[64,512], index: 1, kind: input, shape index: {}]
  %s2 = inlined_call_operand.vmem [shape: f32[1,512], index: 2, kind: input, shape index: {}]
  %s3 = inlined_call_operand.vmem [shape: bf16[512,128], index: 3, kind: input, shape index: {}]
  %s4 = inlined_call_operand.vmem [shape: f32[1,128], index: 4, kind: input, shape index: {}]
  %s5 = inlined_call_operand.hbm [shape: f32[2,128], index: 5, kind: output, shape index: {}]
  %s6 = sld [smem:[#allocation0]]
  $region30: #{dqn_forward.7} parent=0
    _
  %s8 = ssub.s32 1, %s6
  %s9 = scalar_select 0, %s8, %s6
  $region1: #{dqn_forward.7} parent=0
    #allocation2 [shape = 'u8[1024]{0}', space=vmem, size = 0x400, scoped, tag = 'output window, operand 0, single buffered']
    #allocation3 [shape = 's32[1]{0}', space=sflag, size = 0x4, scoped, tag = 'scoped memory for dqn_forward.7']
    %10 = vsyncpa [#allocation3], 0
    // Predicated region
    $region2: #{dqn_forward.7} parent=1 // pred_check
      _
    $region3: #{dqn_forward.7} parent=1 // pred_check_branch
      %12 = sbr.rel (0) target = $region5
    $region4: #{dqn_forward.7} parent=1 // pred_region
      _
    $region5: #{dqn_forward.7} parent=1 // pred_fallthru
      _
    // Predicated region
    $region6: #{dqn_forward.7} parent=1 // pred_check
      _
    $region7: #{dqn_forward.7} parent=1 // pred_check_branch
      %14 = sbr.rel (0) target = $region9
    $region8: #{dqn_forward.7} parent=1 // pred_region
      _
    $region9: #{dqn_forward.7} parent=1 // pred_fallthru
      _
    // Predicated region
    $region10: #{dqn_forward.7} parent=1 // pred_check
      _
    $region11: #{dqn_forward.7} parent=1 // pred_check_branch
      %16 = sbr.rel (0) target = $region13
    $region12: #{dqn_forward.7} parent=1 // pred_region
      _
    $region13: #{dqn_forward.7} parent=1 // pred_fallthru
      _
    // Predicated region
    $region14: #{dqn_forward.7} parent=1 // pred_check
      _
    $region15: #{dqn_forward.7} parent=1 // pred_check_branch
      %18 = sbr.rel (0) target = $region17
    $region16: #{dqn_forward.7} parent=1 // pred_region
      _
    $region17: #{dqn_forward.7} parent=1 // pred_fallthru
      _
    // Predicated region
    $region18: #{dqn_forward.7} parent=1 // pred_check
      _
    $region19: #{dqn_forward.7} parent=1 // pred_check_branch
      %20 = sbr.rel (0) target = $region21
    $region20: #{dqn_forward.7} parent=1 // pred_region
      _
    $region21: #{dqn_forward.7} parent=1 // pred_fallthru
      _
    %v22 = vld [vmem:[%s0] sm:$0x1]
    %v23 = vld [vmem:[%s1] sm:$0xff]
    %v24 = vld [vmem:[%s1 + $0x8] sm:$0xff]
    %v25 = vld [vmem:[%s1 + $0x10] sm:$0xff]
    %v26 = vld [vmem:[%s1 + $0x18] sm:$0xff]
    %v27 = vld [vmem:[%s1 + $0x20] sm:$0xff]
    %v28 = vld [vmem:[%s1 + $0x28] sm:$0xff]
    %v29 = vld [vmem:[%s1 + $0x30] sm:$0xff]
    %v30 = vld [vmem:[%s1 + $0x38] sm:$0xff]
    %v31 = vld [vmem:[%s1 + $0x40] sm:$0xff]
    %v32 = vld [vmem:[%s1 + $0x48] sm:$0xff]
    %v33 = vld [vmem:[%s1 + $0x50] sm:$0xff]
    %v34 = vld [vmem:[%s1 + $0x58] sm:$0xff]
    %v35 = vld [vmem:[%s1 + $0x60] sm:$0xff]
    %v36 = vld [vmem:[%s1 + $0x68] sm:$0xff]
    %v37 = vld [vmem:[%s1 + $0x70] sm:$0xff]
    %v38 = vld [vmem:[%s1 + $0x78] sm:$0xff]
    %v39 = vld [vmem:[%s2] sm:$0xf]
    %v41 = vperm.slane %v39, 0
    %v42 = vperm.slane %v39, 1
    %v43 = vperm.slane %v39, 2
    %v44 = vperm.slane %v39, 3
    %v65 = vunpack.c.l.b16 %v23
    %v66 = vunpack.c.h.b16 %v23
    %v67 = vunpack.c.l.b16 %v24
    %v68 = vunpack.c.h.b16 %v24
    %v69 = vunpack.c.l.b16 %v25
    %v70 = vunpack.c.h.b16 %v25
    %v71 = vunpack.c.l.b16 %v26
    %v72 = vunpack.c.h.b16 %v26
    %v73 = vunpack.c.l.b16 %v27
    %v74 = vunpack.c.h.b16 %v27
    %v75 = vunpack.c.l.b16 %v28
    %v76 = vunpack.c.h.b16 %v28
    %v77 = vunpack.c.l.b16 %v29
    %v78 = vunpack.c.h.b16 %v29
    %v79 = vunpack.c.l.b16 %v30
    %v80 = vunpack.c.h.b16 %v30
    %v81 = vunpack.c.l.b16 %v31
    %v82 = vunpack.c.h.b16 %v31
    %v83 = vunpack.c.l.b16 %v32
    %v84 = vunpack.c.h.b16 %v32
    %v85 = vunpack.c.l.b16 %v33
    %v86 = vunpack.c.h.b16 %v33
    %v87 = vunpack.c.l.b16 %v34
    %v88 = vunpack.c.h.b16 %v34
    %v89 = vunpack.c.l.b16 %v35
    %v90 = vunpack.c.h.b16 %v35
    %v91 = vunpack.c.l.b16 %v36
    %v92 = vunpack.c.h.b16 %v36
    %v93 = vunpack.c.l.b16 %v37
    %v94 = vunpack.c.h.b16 %v37
    %v95 = vunpack.c.l.b16 %v38
    %v96 = vunpack.c.h.b16 %v38
    %v97 = vpack.c.b16 %v69, %v65
    %v98 = vpack.c.b16 %v70, %v66
    %v99 = vpack.c.b16 %v71, %v67
    %v100 = vpack.c.b16 %v72, %v68
    %v101 = vpack.c.b16 %v77, %v73
    %v102 = vpack.c.b16 %v78, %v74
    %v103 = vpack.c.b16 %v79, %v75
    %v104 = vpack.c.b16 %v80, %v76
    %v105 = vpack.c.b16 %v85, %v81
    %v106 = vpack.c.b16 %v86, %v82
    %v107 = vpack.c.b16 %v87, %v83
    %v108 = vpack.c.b16 %v88, %v84
    %v109 = vpack.c.b16 %v93, %v89
    %v110 = vpack.c.b16 %v94, %v90
    %v111 = vpack.c.b16 %v95, %v91
    %v112 = vpack.c.b16 %v96, %v92
    %vm129 = vcmask 523264
    %v131 = vsel %vm129, %v22, 0
    %133 = vmatpush.bf16.msra.mxu0 0
    %134 = vmatpush.bf16.msra.mxu0 0
    %135 = vmatpush.bf16.msra.mxu0 0
    %136 = vmatpush.bf16.msra.mxu0 0
    %137 = vmatpush.bf16.msra.mxu0 %v109
    %138 = vmatpush.bf16.msra.mxu0 %v105
    %139 = vmatpush.bf16.msra.mxu0 %v101
    %140 = vmatpush.bf16.msra.mxu0 %v97
    %141 = vmatmul.bf16.gmra.mxu0 %v131
    %v142 = vpop.f32.mrf.mxu0
    %v143 = vadd.f32 %v41, %v142
    %v144 = vpop.f32.mrf.mxu0
    %145 = vdwg.mxu0
    %146 = vmatpush.bf16.msra.mxu0 0
    %147 = vmatpush.bf16.msra.mxu0 0
    %148 = vmatpush.bf16.msra.mxu0 0
    %149 = vmatpush.bf16.msra.mxu0 0
    %150 = vmatpush.bf16.msra.mxu0 %v110
    %151 = vmatpush.bf16.msra.mxu0 %v106
    %152 = vmatpush.bf16.msra.mxu0 %v102
    %153 = vmatpush.bf16.msra.mxu0 %v98
    %154 = vmatmul.bf16.gmra.mxu0 %v131
    %v155 = vpop.f32.mrf.mxu0
    %v156 = vadd.f32 %v42, %v155
    %v157 = vpop.f32.mrf.mxu0
    %158 = vdwg.mxu0
    %159 = vmatpush.bf16.msra.mxu0 0
    %160 = vmatpush.bf16.msra.mxu0 0
    %161 = vmatpush.bf16.msra.mxu0 0
    %162 = vmatpush.bf16.msra.mxu0 0
    %163 = vmatpush.bf16.msra.mxu0 %v111
    %164 = vmatpush.bf16.msra.mxu0 %v107
    %165 = vmatpush.bf16.msra.mxu0 %v103
    %166 = vmatpush.bf16.msra.mxu0 %v99
    %167 = vmatmul.bf16.gmra.mxu0 %v131
    %v168 = vpop.f32.mrf.mxu0
    %v169 = vadd.f32 %v43, %v168
    %v170 = vpop.f32.mrf.mxu0
    %171 = vdwg.mxu0
    %172 = vmatpush.bf16.msra.mxu0 0
    %173 = vmatpush.bf16.msra.mxu0 0
    %174 = vmatpush.bf16.msra.mxu0 0
    %175 = vmatpush.bf16.msra.mxu0 0
    %176 = vmatpush.bf16.msra.mxu0 %v112
    %177 = vmatpush.bf16.msra.mxu0 %v108
    %178 = vmatpush.bf16.msra.mxu0 %v104
    %179 = vmatpush.bf16.msra.mxu0 %v100
    %180 = vmatmul.bf16.gmra.mxu0 %v131
    %v181 = vpop.f32.mrf.mxu0
    %v182 = vadd.f32 %v44, %v181
    %v183 = vpop.f32.mrf.mxu0
    %184 = vdwg.mxu0
    %v185 = vmax.f32 %v143, 0.0
    %v186 = vmax.f32 %v156, 0.0
    %v187 = vmax.f32 %v169, 0.0
    %v188 = vmax.f32 %v182, 0.0
    %v189 = vpack.c.bf16 %v185, %v185
    %v190 = vpack.c.bf16 %v186, %v186
    %v191 = vpack.c.bf16 %v187, %v187
    %v192 = vpack.c.bf16 %v188, %v188
    %v193 = vld [vmem:[%s3] sm:$0xf]
    %v194 = vld [vmem:[%s3 + $0x4] sm:$0xf]
    %v195 = vld [vmem:[%s3 + $0x8] sm:$0xf]
    %v196 = vld [vmem:[%s3 + $0xc] sm:$0xf]
    %v197 = vld [vmem:[%s3 + $0x10] sm:$0xf]
    %v198 = vld [vmem:[%s3 + $0x14] sm:$0xf]
    %v199 = vld [vmem:[%s3 + $0x18] sm:$0xf]
    %v200 = vld [vmem:[%s3 + $0x1c] sm:$0xf]
    %v201 = vld [vmem:[%s3 + $0x20] sm:$0xf]
    %v202 = vld [vmem:[%s3 + $0x24] sm:$0xf]
    %v203 = vld [vmem:[%s3 + $0x28] sm:$0xf]
    %v204 = vld [vmem:[%s3 + $0x2c] sm:$0xf]
    %v205 = vld [vmem:[%s3 + $0x30] sm:$0xf]
    %v206 = vld [vmem:[%s3 + $0x34] sm:$0xf]
    %v207 = vld [vmem:[%s3 + $0x38] sm:$0xf]
    %v208 = vld [vmem:[%s3 + $0x3c] sm:$0xf]
    %v209 = vld [vmem:[%s3 + $0x40] sm:$0xf]
    %v210 = vld [vmem:[%s3 + $0x44] sm:$0xf]
    %v211 = vld [vmem:[%s3 + $0x48] sm:$0xf]
    %v212 = vld [vmem:[%s3 + $0x4c] sm:$0xf]
    %v213 = vld [vmem:[%s3 + $0x50] sm:$0xf]
    %v214 = vld [vmem:[%s3 + $0x54] sm:$0xf]
    %v215 = vld [vmem:[%s3 + $0x58] sm:$0xf]
    %v216 = vld [vmem:[%s3 + $0x5c] sm:$0xf]
    %v217 = vld [vmem:[%s3 + $0x60] sm:$0xf]
    %v218 = vld [vmem:[%s3 + $0x64] sm:$0xf]
    %v219 = vld [vmem:[%s3 + $0x68] sm:$0xf]
    %v220 = vld [vmem:[%s3 + $0x6c] sm:$0xf]
    %v221 = vld [vmem:[%s3 + $0x70] sm:$0xf]
    %v222 = vld [vmem:[%s3 + $0x74] sm:$0xf]
    %v223 = vld [vmem:[%s3 + $0x78] sm:$0xf]
    %v224 = vld [vmem:[%s3 + $0x7c] sm:$0xf]
    %v225 = vld [vmem:[%s3 + $0x80] sm:$0xf]
    %v226 = vld [vmem:[%s3 + $0x84] sm:$0xf]
    %v227 = vld [vmem:[%s3 + $0x88] sm:$0xf]
    %v228 = vld [vmem:[%s3 + $0x8c] sm:$0xf]
    %v229 = vld [vmem:[%s3 + $0x90] sm:$0xf]
    %v230 = vld [vmem:[%s3 + $0x94] sm:$0xf]
    %v231 = vld [vmem:[%s3 + $0x98] sm:$0xf]
    %v232 = vld [vmem:[%s3 + $0x9c] sm:$0xf]
    %v233 = vld [vmem:[%s3 + $0xa0] sm:$0xf]
    %v234 = vld [vmem:[%s3 + $0xa4] sm:$0xf]
    %v235 = vld [vmem:[%s3 + $0xa8] sm:$0xf]
    %v236 = vld [vmem:[%s3 + $0xac] sm:$0xf]
    %v237 = vld [vmem:[%s3 + $0xb0] sm:$0xf]
    %v238 = vld [vmem:[%s3 + $0xb4] sm:$0xf]
    %v239 = vld [vmem:[%s3 + $0xb8] sm:$0xf]
    %v240 = vld [vmem:[%s3 + $0xbc] sm:$0xf]
    %v241 = vld [vmem:[%s3 + $0xc0] sm:$0xf]
    %v242 = vld [vmem:[%s3 + $0xc4] sm:$0xf]
    %v243 = vld [vmem:[%s3 + $0xc8] sm:$0xf]
    %v244 = vld [vmem:[%s3 + $0xcc] sm:$0xf]
    %v245 = vld [vmem:[%s3 + $0xd0] sm:$0xf]
    %v246 = vld [vmem:[%s3 + $0xd4] sm:$0xf]
    %v247 = vld [vmem:[%s3 + $0xd8] sm:$0xf]
    %v248 = vld [vmem:[%s3 + $0xdc] sm:$0xf]
    %v249 = vld [vmem:[%s3 + $0xe0] sm:$0xf]
    %v250 = vld [vmem:[%s3 + $0xe4] sm:$0xf]
    %v251 = vld [vmem:[%s3 + $0xe8] sm:$0xf]
    %v252 = vld [vmem:[%s3 + $0xec] sm:$0xf]
    %v253 = vld [vmem:[%s3 + $0xf0] sm:$0xf]
    %v254 = vld [vmem:[%s3 + $0xf4] sm:$0xf]
    %v255 = vld [vmem:[%s3 + $0xf8] sm:$0xf]
    %v256 = vld [vmem:[%s3 + $0xfc] sm:$0xf]
    %v257 = vld [vmem:[%s4] sm:$0x1]
    %v259 = vperm.slane %v257, 0
    %v325 = vunpack.c.l.b16 %v193
    %v326 = vunpack.c.l.b16 %v194
    %v327 = vunpack.c.l.b16 %v195
    %v328 = vunpack.c.l.b16 %v196
    %v329 = vunpack.c.l.b16 %v197
    %v330 = vunpack.c.l.b16 %v198
    %v331 = vunpack.c.l.b16 %v199
    %v332 = vunpack.c.l.b16 %v200
    %v333 = vunpack.c.l.b16 %v201
    %v334 = vunpack.c.l.b16 %v202
    %v335 = vunpack.c.l.b16 %v203
    %v336 = vunpack.c.l.b16 %v204
    %v337 = vunpack.c.l.b16 %v205
    %v338 = vunpack.c.l.b16 %v206
    %v339 = vunpack.c.l.b16 %v207
    %v340 = vunpack.c.l.b16 %v208
    %v341 = vunpack.c.l.b16 %v209
    %v342 = vunpack.c.l.b16 %v210
    %v343 = vunpack.c.l.b16 %v211
    %v344 = vunpack.c.l.b16 %v212
    %v345 = vunpack.c.l.b16 %v213
    %v346 = vunpack.c.l.b16 %v214
    %v347 = vunpack.c.l.b16 %v215
    %v348 = vunpack.c.l.b16 %v216
    %v349 = vunpack.c.l.b16 %v217
    %v350 = vunpack.c.l.b16 %v218
    %v351 = vunpack.c.l.b16 %v219
    %v352 = vunpack.c.l.b16 %v220
    %v353 = vunpack.c.l.b16 %v221
    %v354 = vunpack.c.l.b16 %v222
    %v355 = vunpack.c.l.b16 %v223
    %v356 = vunpack.c.l.b16 %v224
    %v357 = vunpack.c.l.b16 %v225
    %v358 = vunpack.c.l.b16 %v226
    %v359 = vunpack.c.l.b16 %v227
    %v360 = vunpack.c.l.b16 %v228
    %v361 = vunpack.c.l.b16 %v229
    %v362 = vunpack.c.l.b16 %v230
    %v363 = vunpack.c.l.b16 %v231
    %v364 = vunpack.c.l.b16 %v232
    %v365 = vunpack.c.l.b16 %v233
    %v366 = vunpack.c.l.b16 %v234
    %v367 = vunpack.c.l.b16 %v235
    %v368 = vunpack.c.l.b16 %v236
    %v369 = vunpack.c.l.b16 %v237
    %v370 = vunpack.c.l.b16 %v238
    %v371 = vunpack.c.l.b16 %v239
    %v372 = vunpack.c.l.b16 %v240
    %v373 = vunpack.c.l.b16 %v241
    %v374 = vunpack.c.l.b16 %v242
    %v375 = vunpack.c.l.b16 %v243
    %v376 = vunpack.c.l.b16 %v244
    %v377 = vunpack.c.l.b16 %v245
    %v378 = vunpack.c.l.b16 %v246
    %v379 = vunpack.c.l.b16 %v247
    %v380 = vunpack.c.l.b16 %v248
    %v381 = vunpack.c.l.b16 %v249
    %v382 = vunpack.c.l.b16 %v250
    %v383 = vunpack.c.l.b16 %v251
    %v384 = vunpack.c.l.b16 %v252
    %v385 = vunpack.c.l.b16 %v253
    %v386 = vunpack.c.l.b16 %v254
    %v387 = vunpack.c.l.b16 %v255
    %v388 = vunpack.c.l.b16 %v256
    %v389 = vpack.c.b16 %v326, %v325
    %v390 = vpack.c.b16 %v328, %v327
    %v391 = vpack.c.b16 %v330, %v329
    %v392 = vpack.c.b16 %v332, %v331
    %v393 = vpack.c.b16 %v334, %v333
    %v394 = vpack.c.b16 %v336, %v335
    %v395 = vpack.c.b16 %v338, %v337
    %v396 = vpack.c.b16 %v340, %v339
    %v397 = vpack.c.b16 %v342, %v341
    %v398 = vpack.c.b16 %v344, %v343
    %v399 = vpack.c.b16 %v346, %v345
    %v400 = vpack.c.b16 %v348, %v347
    %v401 = vpack.c.b16 %v350, %v349
    %v402 = vpack.c.b16 %v352, %v351
    %v403 = vpack.c.b16 %v354, %v353
    %v404 = vpack.c.b16 %v356, %v355
    %v405 = vpack.c.b16 %v358, %v357
    %v406 = vpack.c.b16 %v360, %v359
    %v407 = vpack.c.b16 %v362, %v361
    %v408 = vpack.c.b16 %v364, %v363
    %v409 = vpack.c.b16 %v366, %v365
    %v410 = vpack.c.b16 %v368, %v367
    %v411 = vpack.c.b16 %v370, %v369
    %v412 = vpack.c.b16 %v372, %v371
    %v413 = vpack.c.b16 %v374, %v373
    %v414 = vpack.c.b16 %v376, %v375
    %v415 = vpack.c.b16 %v378, %v377
    %v416 = vpack.c.b16 %v380, %v379
    %v417 = vpack.c.b16 %v382, %v381
    %v418 = vpack.c.b16 %v384, %v383
    %v419 = vpack.c.b16 %v386, %v385
    %v420 = vpack.c.b16 %v388, %v387
    %453 = vmatpush.bf16.msra.mxu0 %v396
    %454 = vmatpush.bf16.msra.mxu0 %v395
    %455 = vmatpush.bf16.msra.mxu0 %v394
    %456 = vmatpush.bf16.msra.mxu0 %v393
    %457 = vmatpush.bf16.msra.mxu0 %v392
    %458 = vmatpush.bf16.msra.mxu0 %v391
    %459 = vmatpush.bf16.msra.mxu0 %v390
    %460 = vmatpush.bf16.msra.mxu0 %v389
    %461 = vmatmul.bf16.gmra.mxu0 %v189
    %v462 = vpop.f32.mrf.mxu0
    %v463 = vadd.f32 %v259, %v462
    %v464 = vpop.f32.mrf.mxu0
    %465 = vdwg.mxu0
    %466 = vmatpush.bf16.msra.mxu0 %v404
    %467 = vmatpush.bf16.msra.mxu0 %v403
    %468 = vmatpush.bf16.msra.mxu0 %v402
    %469 = vmatpush.bf16.msra.mxu0 %v401
    %470 = vmatpush.bf16.msra.mxu0 %v400
    %471 = vmatpush.bf16.msra.mxu0 %v399
    %472 = vmatpush.bf16.msra.mxu0 %v398
    %473 = vmatpush.bf16.msra.mxu0 %v397
    %474 = vmatmul.bf16.gmra.mxu0 %v190
    %v475 = vpop.f32.mrf.mxu0
    %v476 = vadd.f32 %v463, %v475
    %v477 = vpop.f32.mrf.mxu0
    %478 = vdwg.mxu0
    %479 = vmatpush.bf16.msra.mxu0 %v412
    %480 = vmatpush.bf16.msra.mxu0 %v411
    %481 = vmatpush.bf16.msra.mxu0 %v410
    %482 = vmatpush.bf16.msra.mxu0 %v409
    %483 = vmatpush.bf16.msra.mxu0 %v408
    %484 = vmatpush.bf16.msra.mxu0 %v407
    %485 = vmatpush.bf16.msra.mxu0 %v406
    %486 = vmatpush.bf16.msra.mxu0 %v405
    %487 = vmatmul.bf16.gmra.mxu0 %v191
    %v488 = vpop.f32.mrf.mxu0
    %v489 = vadd.f32 %v476, %v488
    %v490 = vpop.f32.mrf.mxu0
    %491 = vdwg.mxu0
    %492 = vmatpush.bf16.msra.mxu0 %v420
    %493 = vmatpush.bf16.msra.mxu0 %v419
    %494 = vmatpush.bf16.msra.mxu0 %v418
    %495 = vmatpush.bf16.msra.mxu0 %v417
    %496 = vmatpush.bf16.msra.mxu0 %v416
    %497 = vmatpush.bf16.msra.mxu0 %v415
    %498 = vmatpush.bf16.msra.mxu0 %v414
    %499 = vmatpush.bf16.msra.mxu0 %v413
    %500 = vmatmul.bf16.gmra.mxu0 %v192
    %v501 = vpop.f32.mrf.mxu0
    %v502 = vadd.f32 %v489, %v501
    %v503 = vpop.f32.mrf.mxu0
    %504 = vdwg.mxu0
    %505 = vst [vmem:[#allocation2] sm:$0x3] %v502
    // Predicated region
    $region22: #{dqn_forward.7} parent=1 // pred_check
      _
    $region23: #{dqn_forward.7} parent=1 // pred_check_branch
      %507 = sbr.rel (0) target = $region25
    $region24: #{dqn_forward.7} parent=1 // pred_region
      %509 = vsyncadd [#allocation3], 0
      %s511 = sshll.u32 [#allocation2], 4
      %s512 = int_to_ptr.vmem [resolvable:$true] %s511
      %s513 = sshll.u32 %s5, 4
      %s514 = int_to_ptr.hbm [resolvable:$true] %s513
      %516 = dma.vmem_to_hbm [thread:$0]  %s512, 32, %s514, [#allocation3]
    $region25: #{dqn_forward.7} parent=1 // pred_fallthru
      _
    // Predicated region
    $region26: #{dqn_forward.7} parent=1 // pred_check
      _
    $region27: #{dqn_forward.7} parent=1 // pred_check_branch
      %518 = sbr.rel (0) target = $region29
    $region28: #{dqn_forward.7} parent=1 // pred_region
      %520 = dma.done [#allocation3], 32
    $region29: #{dqn_forward.7} parent=1 // pred_fallthru
      _
    %521 = vsyncpa [#allocation3], 1

</llo_original>
